<compile_context>
chip_gen: v5e
topology: v5e:2x2
jax: 0.10.0
libtpu: 0.0.40
codegen_flags: <defaults>
</compile_context>

<pallas_src>
import math
import functools

import jax
import jax.numpy as jnp
from jax.experimental import pallas as pl
from jax.experimental.pallas import tpu as pltpu


# ----------------------------- shared math helpers ---------------------------
def _layer_norm(x, gamma, beta, eps=1e-5):
    mean = jnp.mean(x, axis=-1, keepdims=True)
    var = jnp.mean((x - mean) ** 2, axis=-1, keepdims=True)
    return (x - mean) * jax.lax.rsqrt(var + eps) * gamma + beta


# --------------------------------- kernel ------------------------------------
def btc_transformer_kernel(
    x_ref, pe_ref,
    w_emb_ref, b_emb_ref,
    w_qkv_ref, b_qkv_ref, w_ao_ref, b_ao_ref,
    w_ff1_ref, b_ff1_ref, w_ff2_ref, b_ff2_ref,
    g1_ref, bt1_ref, g2_ref, bt2_ref,
    o_ref,
    h_scr,
    *, nhead, d_model, bb, seq, d_out,
):
    f32 = jnp.float32
    bf16 = jnp.bfloat16
    hd = d_model // nhead
    n = bb * seq                                             # folded rows
    l = pl.program_id(1)

    # ------- layer-0 prologue: embedding (sqrt(d_model) pre-folded) + pos-enc -----
    @pl.when(l == 0)
    def _():
        x2 = x_ref[...].reshape(n, x_ref.shape[-1])          # (N, input_dim) f32
        e = jnp.dot(x2.astype(bf16), w_emb_ref[...],
                    preferred_element_type=f32) + b_emb_ref[...]
        # pe is indexed by batch id and broadcast over the sequence axis (module quirk)
        h_scr[...] = (e.reshape(bb, seq, d_model) + pe_ref[...]).reshape(n, d_model)

    h = h_scr[...]                                           # (N, D) f32 residual

    # ------------------- self attention (post-norm) ------------------------------
    # 1/sqrt(hd) is pre-folded into the Q columns of w_qkv / b_qkv.
    qkv = jnp.dot(h.astype(bf16), w_qkv_ref[0],
                  preferred_element_type=f32) + b_qkv_ref[0]          # (N, 3D)
    heads = []
    for hh in range(nhead):
        q = qkv[:, 0 * d_model + hh * hd: 0 * d_model + (hh + 1) * hd]
        k = qkv[:, 1 * d_model + hh * hd: 1 * d_model + (hh + 1) * hd]
        v = qkv[:, 2 * d_model + hh * hd: 2 * d_model + (hh + 1) * hd]
        qh = q.reshape(bb, seq, hd)
        kh = k.reshape(bb, seq, hd)
        vh = v.reshape(bb, seq, hd)
        s = jnp.einsum('bqd,bkd->bqk', qh.astype(bf16), kh.astype(bf16),
                       preferred_element_type=f32)                    # (bb,S,S)
        m = jnp.max(s, axis=-1, keepdims=True)
        e = jnp.exp(s - m)
        p = e * pl.reciprocal(jnp.sum(e, axis=-1, keepdims=True), approx=True)
        oh = jnp.einsum('bqk,bkd->bqd', p.astype(bf16), vh.astype(bf16),
                        preferred_element_type=f32)                   # (bb,S,hd)
        heads.append(oh.reshape(n, hd))
    # lane-concat the heads and run ONE output projection with K = d_model
    # (replaces nhead K=hd dots + serial accumulator).
    attn = jnp.concatenate(heads, axis=-1)                            # (N, D)
    attn = jnp.dot(attn.astype(bf16), w_ao_ref[0],
                   preferred_element_type=f32) + b_ao_ref[0]
    h1 = _layer_norm(h + attn, g1_ref[0], bt1_ref[0])

    # ------------------- feed forward (ReLU) -------------------------------------
    ff = jnp.dot(h1.astype(bf16), w_ff1_ref[0],
                 preferred_element_type=f32) + b_ff1_ref[0]
    ff = jnp.maximum(ff, 0.0)
    ff = jnp.dot(ff.astype(bf16), w_ff2_ref[0],
                 preferred_element_type=f32) + b_ff2_ref[0]
    h_scr[...] = _layer_norm(h1 + ff, g2_ref[0], bt2_ref[0])

    # ------- last-layer epilogue: lane-dense last-token store --------------------
    @pl.when(l == pl.num_programs(1) - 1)
    def _():
        last = h_scr[...].reshape(bb, seq, d_model)[:, seq - 1, :]    # (BB, D)
        if d_out > d_model:                                           # pad to 128 lanes
            last = jnp.concatenate(
                [last, jnp.zeros((bb, d_out - d_model), f32)], axis=-1)
        o_ref[0] = last


# --------------------------- one-time parameter prep -------------------------
def prepare_params(params, *, nhead):
    """Hoisted (one-time) transposes / bf16 casts / constant folds."""
    d_model = params["w_emb"].shape[0]
    assert d_model % nhead == 0, "d_model must be divisible by nhead"
    hd = d_model // nhead
    bf16 = jnp.bfloat16
    f32 = jnp.float32

    sqrt_d = math.sqrt(d_model)
    inv_sqrt_hd = 1.0 / math.sqrt(hd)

    # embedding: fold the * sqrt(d_model) into weight and bias
    w_emb_t = (params["w_emb"].T * sqrt_d).astype(bf16)                 # (in, D)
    b_emb = (params["b_emb"] * sqrt_d).astype(f32)                      # (1, D)

    # qkv: transpose to (L, D, 3D) and fold 1/sqrt(hd) into the Q columns
    q_scale = jnp.concatenate([
        jnp.full((d_model,), inv_sqrt_hd, f32),
        jnp.ones((2 * d_model,), f32)])
    w_qkv_t = (jnp.transpose(params["w_qkv"], (0, 2, 1)) * q_scale).astype(bf16)
    b_qkv = (params["b_qkv"] * q_scale).astype(f32)                     # (L, 1, 3D)

    w_ao_t = jnp.transpose(params["w_ao"], (0, 2, 1)).astype(bf16)      # (L, D, D)
    w_ff1_t = jnp.transpose(params["w_ff1"], (0, 2, 1)).astype(bf16)    # (L, D, F)
    w_ff2_t = jnp.transpose(params["w_ff2"], (0, 2, 1)).astype(bf16)    # (L, F, D)

    return {
        "pe": params["pe"],
        "w_emb": w_emb_t, "b_emb": b_emb,
        "w_qkv": w_qkv_t, "b_qkv": b_qkv,
        "w_ao": w_ao_t, "b_ao": params["b_ao"],
        "w_ff1": w_ff1_t, "b_ff1": params["b_ff1"],
        "w_ff2": w_ff2_t, "b_ff2": params["b_ff2"],
        "g1": params["g1"], "bt1": params["bt1"],
        "g2": params["g2"], "bt2": params["bt2"],
        "w_out_t": params["w_out"].T, "b_out": params["b_out"],
    }


# -------------------------------- wrapper ------------------------------------
def _mxu_m_target():
    # v6e / v7x MXUs are 2x256x256 -> target M ~= 256; older (v5e, 4x128x128) -> 128.
    try:
        kind = jax.devices()[0].device_kind.lower()
    except Exception:
        return 128
    return 256 if ("v6" in kind or "v7" in kind or "7x" in kind) else 128


def _choose_bb(B, S):
    bb = max(1, _mxu_m_target() // max(1, S))
    for _ in range(8):                          # make folded rows a multiple of 8
        if (bb * S) % 8 == 0:
            break
        bb += 1
    # keep >= 2 batch blocks so the "parallel" axis can shard across 2 TensorCores
    bb = min(bb, max(1, -(-B // 2)))
    return max(1, bb)


def btc_price_transformer(x, prepped, *, nhead):
    B, S, input_dim = x.shape
    d_model = prepped["w_emb"].shape[1]
    nlayers = prepped["w_qkv"].shape[0]
    dim_ff = prepped["w_ff1"].shape[2]
    d_out = ((d_model + 127) // 128) * 128      # lane-dense output width

    BB = _choose_bb(B, S)
    nblk = pl.cdiv(B, BB)
    B_pad = nblk * BB

    xp = x if B_pad == B else jnp.pad(x, ((0, B_pad - B), (0, 0), (0, 0)))
    pe = prepped["pe"]
    pep = pe if B_pad == B else jnp.pad(pe, ((0, B_pad - B), (0, 0), (0, 0)))

    # per-layer streamed weights (one layer slice per grid step on the l axis)
    layer_ordered = [prepped[k] for k in (
        "w_qkv", "b_qkv", "w_ao", "b_ao",
        "w_ff1", "b_ff1", "w_ff2", "b_ff2",
        "g1", "bt1", "g2", "bt2")]

    def _per_layer_spec(shape):
        return pl.BlockSpec((1,) + tuple(shape[1:]), lambda i, l: (l, 0, 0))

    in_specs = [
        pl.BlockSpec((BB, S, input_dim), lambda i, l: (i, 0, 0)),   # x
        pl.BlockSpec((BB, 1, d_model), lambda i, l: (i, 0, 0)),     # pe
        pl.BlockSpec(prepped["w_emb"].shape, lambda i, l: (0, 0)),  # w_emb (const)
        pl.BlockSpec(prepped["b_emb"].shape, lambda i, l: (0, 0)),  # b_emb (const)
    ]
    in_specs += [_per_layer_spec(a.shape) for a in layer_ordered]

    # explicit VMEM budget: 2x (streamed blocks) + scratch + headroom, >= default
    def _slice_bytes(a):
        return (a.size // a.shape[0]) * a.dtype.itemsize
    blk_bytes = (BB * S * input_dim * 4 + BB * d_model * 4
                 + prepped["w_emb"].size * 2 + prepped["b_emb"].size * 4
                 + sum(_slice_bytes(a) for a in layer_ordered)
                 + BB * d_out * 4)
    scratch_bytes = BB * S * d_model * 4
    vmem_need = 2 * blk_bytes + scratch_bytes + (8 << 20)
    vmem_limit = int(min(max(vmem_need, 32 << 20), 64 << 20))

    kernel = functools.partial(
        btc_transformer_kernel, nhead=nhead,
        d_model=d_model, bb=BB, seq=S, d_out=d_out)

    out = pl.pallas_call(
        kernel,
        out_shape=jax.ShapeDtypeStruct((nblk, BB, d_out), jnp.float32),
        grid=(nblk, nlayers),
        in_specs=in_specs,
        out_specs=pl.BlockSpec((1, BB, d_out), lambda i, l: (i, 0, 0)),
        scratch_shapes=[pltpu.VMEM((BB * S, d_model), jnp.float32)],
        compiler_params=pltpu.CompilerParams(
            dimension_semantics=("parallel", "arbitrary"),
            vmem_limit_bytes=vmem_limit),
    )(xp, pep, prepped["w_emb"], prepped["b_emb"], *layer_ordered)

    last = out.reshape(B_pad, d_out)[:B, :d_model]
    # 1-wide regression head applied outside the kernel (kernel output stays lane-dense)
    return last @ prepped["w_out_t"] + prepped["b_out"]


# --------------------------- params / reference ------------------------------
def make_positional_encoding(batch, d_model, max_len=5000):
    position = jnp.arange(max_len, dtype=jnp.float32)[:, None]
    div_term = jnp.exp(jnp.arange(0, d_model, 2, dtype=jnp.float32)
                       * (-math.log(10000.0) / d_model))
    pe = jnp.zeros((max_len, d_model), jnp.float32)
    pe = pe.at[:, 0::2].set(jnp.sin(position * div_term))
    pe = pe.at[:, 1::2].set(jnp.cos(position * div_term))
    # module adds pe[:x.size(0)] -> only first `batch` rows are used
    return pe[:batch].reshape(batch, 1, d_model)


def init_params(key, input_dim, d_model, nhead, nlayers, dim_ff, batch):
    ks = jax.random.split(key, 12)
    u = lambda k, shape, a: jax.random.uniform(k, shape, jnp.float32, -a, a)
    s_d = 1.0 / math.sqrt(d_model)
    s_f = 1.0 / math.sqrt(dim_ff)
    return {
        "pe": make_positional_encoding(batch, d_model),
        # embedding: init_weights() -> weight uniform(-0.1, 0.1), bias default
        "w_emb": u(ks[0], (d_model, input_dim), 0.1),
        "b_emb": u(ks[1], (1, d_model), 1.0 / math.sqrt(input_dim)),
        # per-layer transformer weights (stacked on leading nlayers axis)
        "w_qkv": u(ks[2], (nlayers, 3 * d_model, d_model), s_d),
        "b_qkv": u(ks[3], (nlayers, 1, 3 * d_model), s_d),
        "w_ao":  u(ks[4], (nlayers, d_model, d_model), s_d),
        "b_ao":  u(ks[5], (nlayers, 1, d_model), s_d),
        "w_ff1": u(ks[6], (nlayers, dim_ff, d_model), s_d),
        "b_ff1": u(ks[7], (nlayers, 1, dim_ff), s_d),
        "w_ff2": u(ks[8], (nlayers, d_model, dim_ff), s_f),
        "b_ff2": u(ks[9], (nlayers, 1, d_model), s_f),
        "g1":  jnp.ones((nlayers, 1, d_model), jnp.float32),
        "bt1": jnp.zeros((nlayers, 1, d_model), jnp.float32),
        "g2":  jnp.ones((nlayers, 1, d_model), jnp.float32),
        "bt2": jnp.zeros((nlayers, 1, d_model), jnp.float32),
        # regression head: weight uniform(-0.1, 0.1), bias zero
        "w_out": u(ks[10], (1, d_model), 0.1),
        "b_out": jnp.zeros((1, 1), jnp.float32),
    }


def reference_forward(x, params, *, nhead):
    """Pure-JAX f32 reference mirroring the PyTorch forward (eval mode)."""
    B, S, _ = x.shape
    d_model = params["w_emb"].shape[0]
    nlayers = params["w_qkv"].shape[0]
    head_dim = d_model // nhead

    h = x @ params["w_emb"].T + params["b_emb"]
    h = h * math.sqrt(d_model)
    h = h + params["pe"]                                      # (B,1,D) broadcast over S
    for l in range(nlayers):
        qkv = h @ params["w_qkv"][l].T + params["b_qkv"][l]
        q, k, v = jnp.split(qkv, 3, axis=-1)
        q = q.reshape(B, S, nhead, head_dim).transpose(0, 2, 1, 3)
        k = k.reshape(B, S, nhead, head_dim).transpose(0, 2, 1, 3)
        v = v.reshape(B, S, nhead, head_dim).transpose(0, 2, 1, 3)
        scores = jnp.einsum("bhqd,bhkd->bhqk", q, k) / math.sqrt(head_dim)
        probs = jax.nn.softmax(scores, axis=-1)
        attn = jnp.einsum("bhqk,bhkd->bhqd", probs, v)
        attn = attn.transpose(0, 2, 1, 3).reshape(B, S, d_model)
        attn = attn @ params["w_ao"][l].T + params["b_ao"][l]
        h = _layer_norm(h + attn, params["g1"][l], params["bt1"][l])
        ff = jnp.maximum(h @ params["w_ff1"][l].T + params["b_ff1"][l], 0.0)
        ff = ff @ params["w_ff2"][l].T + params["b_ff2"][l]
        h = _layer_norm(h + ff, params["g2"][l], params["bt2"][l])
    last = h[:, -1, :]
    return last @ params["w_out"].T + params["b_out"]


# ---------------------------------- main --------------------------------------
if __name__ == "__main__":
    B, S = 2, 8
    input_dim, d_model, nhead, nlayers, dim_ff = 4, 32, 4, 2, 64

    key = jax.random.PRNGKey(0)
    k_x, k_p = jax.random.split(key)
    x = jax.random.normal(k_x, (B, S, input_dim), jnp.float32)
    params = init_params(k_p, input_dim, d_model, nhead, nlayers, dim_ff, batch=B)

    prepped = prepare_params(params, nhead=nhead)             # one-time weight prep
    out = btc_price_transformer(x, prepped, nhead=nhead)
    out = jax.block_until_ready(out)

    ref = reference_forward(x, params, nhead=nhead)
    assert out.shape == (B, 1), out.shape
    assert bool(jnp.all(jnp.isfinite(out)))
    assert bool(jnp.allclose(out, ref, rtol=2e-2, atol=2e-2)), (out, ref)

    print("KERNEL_OK")
</pallas_src>

<mosaic_0001>
module attributes {stable_mosaic.version = 11 : i64} {
  func.func @btc_transformer_kernel(%arg0: i32, %arg1: i32, %arg2: memref<1x8x4xf32, #tpu.memory_space<vmem>>, %arg3: memref<1x1x32xf32, #tpu.memory_space<vmem>>, %arg4: memref<4x32xbf16, #tpu.memory_space<vmem>>, %arg5: memref<1x32xf32, #tpu.memory_space<vmem>>, %arg6: memref<1x32x96xbf16, #tpu.memory_space<vmem>>, %arg7: memref<1x1x96xf32, #tpu.memory_space<vmem>>, %arg8: memref<1x32x32xbf16, #tpu.memory_space<vmem>>, %arg9: memref<1x1x32xf32, #tpu.memory_space<vmem>>, %arg10: memref<1x32x64xbf16, #tpu.memory_space<vmem>>, %arg11: memref<1x1x64xf32, #tpu.memory_space<vmem>>, %arg12: memref<1x64x32xbf16, #tpu.memory_space<vmem>>, %arg13: memref<1x1x32xf32, #tpu.memory_space<vmem>>, %arg14: memref<1x1x32xf32, #tpu.memory_space<vmem>>, %arg15: memref<1x1x32xf32, #tpu.memory_space<vmem>>, %arg16: memref<1x1x32xf32, #tpu.memory_space<vmem>>, %arg17: memref<1x1x32xf32, #tpu.memory_space<vmem>>, %arg18: memref<1x1x128xf32, #tpu.memory_space<vmem>>, %arg19: memref<8x32xf32, #tpu.memory_space<vmem>>) attributes {dimension_semantics = [#tpu.dimension_semantics<parallel>, #tpu.dimension_semantics<arbitrary>], iteration_bounds = array<i64: 2, 2>, scalar_prefetch = 0 : i64, scratch_operands = 1 : i64, tpu.core_type = #tpu.core_type<tc>, window_params = [{transform_indices = @transform_0, window_bounds = array<i64: 1, 8, 4>}, {transform_indices = @transform_1, window_bounds = array<i64: 1, 1, 32>}, {pipeline_mode = #tpu.pipeline_mode<synchronous>, transform_indices = @transform_2, window_bounds = array<i64: 4, 32>}, {pipeline_mode = #tpu.pipeline_mode<synchronous>, transform_indices = @transform_3, window_bounds = array<i64: 1, 32>}, {transform_indices = @transform_4, window_bounds = array<i64: 1, 32, 96>}, {transform_indices = @transform_5, window_bounds = array<i64: 1, 1, 96>}, {transform_indices = @transform_6, window_bounds = array<i64: 1, 32, 32>}, {transform_indices = @transform_7, window_bounds = array<i64: 1, 1, 32>}, {transform_indices = @transform_8, window_bounds = array<i64: 1, 32, 64>}, {transform_indices = @transform_9, window_bounds = array<i64: 1, 1, 64>}, {transform_indices = @transform_10, window_bounds = array<i64: 1, 64, 32>}, {transform_indices = @transform_11, window_bounds = array<i64: 1, 1, 32>}, {transform_indices = @transform_12, window_bounds = array<i64: 1, 1, 32>}, {transform_indices = @transform_13, window_bounds = array<i64: 1, 1, 32>}, {transform_indices = @transform_14, window_bounds = array<i64: 1, 1, 32>}, {transform_indices = @transform_15, window_bounds = array<i64: 1, 1, 32>}, {transform_indices = @transform_16, window_bounds = array<i64: 1, 1, 128>}]} {
    %c0_i32 = arith.constant 0 : i32
    %0 = arith.cmpi eq, %arg1, %c0_i32 : i32
    %1 = arith.extui %0 : i1 to i32
    %c0_i32_0 = arith.constant 0 : i32
    %2 = arith.cmpi ne, %1, %c0_i32_0 : i32
    scf.if %2 {
      %c0_71 = arith.constant 0 : index
      %c0_72 = arith.constant 0 : index
      %c0_73 = arith.constant 0 : index
      %189 = vector.load %arg2[%c0_71, %c0_72, %c0_73] : memref<1x8x4xf32, #tpu.memory_space<vmem>>, vector<1x8x4xf32>
      %190 = vector.shape_cast %189 : vector<1x8x4xf32> to vector<8x4xf32>
      %191 = arith.truncf %190 : vector<8x4xf32> to vector<8x4xbf16>
      %c0_74 = arith.constant 0 : index
      %c0_75 = arith.constant 0 : index
      %192 = vector.load %arg4[%c0_74, %c0_75] : memref<4x32xbf16, #tpu.memory_space<vmem>>, vector<4x32xbf16>
      %cst_76 = arith.constant dense<0.000000e+00> : vector<8x32xf32>
      %193 = tpu.matmul %191, %192, %cst_76 {dimension_numbers = #tpu.dot_dimension_numbers<[1], [0], [0], [1], [0, 0, 1, 1], [], []>} : vector<8x4xbf16>, vector<4x32xbf16>, vector<8x32xf32> -> vector<8x32xf32>
      %c0_77 = arith.constant 0 : index
      %c0_78 = arith.constant 0 : index
      %194 = vector.load %arg5[%c0_77, %c0_78] : memref<1x32xf32, #tpu.memory_space<vmem>>, vector<1x32xf32>
      %195 = vector.broadcast %194 : vector<1x32xf32> to vector<8x32xf32>
      %196 = arith.addf %193, %195 : vector<8x32xf32>
      %197 = vector.shape_cast %196 : vector<8x32xf32> to vector<1x8x32xf32>
      %c0_79 = arith.constant 0 : index
      %c0_80 = arith.constant 0 : index
      %c0_81 = arith.constant 0 : index
      %198 = vector.load %arg3[%c0_79, %c0_80, %c0_81] : memref<1x1x32xf32, #tpu.memory_space<vmem>>, vector<1x1x32xf32>
      %199 = vector.broadcast %198 : vector<1x1x32xf32> to vector<1x8x32xf32>
      %200 = arith.addf %197, %199 : vector<1x8x32xf32>
      %201 = vector.shape_cast %200 : vector<1x8x32xf32> to vector<8x32xf32>
      %c0_82 = arith.constant 0 : index
      %c0_83 = arith.constant 0 : index
      %202 = vector.load %arg19[%c0_82, %c0_83] : memref<8x32xf32, #tpu.memory_space<vmem>>, vector<8x32xf32>
      tpu.vector_store %arg19[%c0_82, %c0_83], %201 {strides = array<i32>} : memref<8x32xf32, #tpu.memory_space<vmem>>, vector<8x32xf32>,
    } else {
    }
    %c0 = arith.constant 0 : index
    %c0_1 = arith.constant 0 : index
    %3 = vector.load %arg19[%c0, %c0_1] : memref<8x32xf32, #tpu.memory_space<vmem>>, vector<8x32xf32>
    %4 = arith.truncf %3 : vector<8x32xf32> to vector<8x32xbf16>
    %c0_2 = arith.constant 0 : index
    %c0_3 = arith.constant 0 : index
    %c0_4 = arith.constant 0 : index
    %5 = vector.load %arg6[%c0_2, %c0_3, %c0_4] : memref<1x32x96xbf16, #tpu.memory_space<vmem>>, vector<1x32x96xbf16>
    %6 = vector.shape_cast %5 : vector<1x32x96xbf16> to vector<32x96xbf16>
    %cst = arith.constant dense<0.000000e+00> : vector<8x96xf32>
    %7 = tpu.matmul %4, %6, %cst {dimension_numbers = #tpu.dot_dimension_numbers<[1], [0], [0], [1], [0, 0, 1, 1], [], []>} : vector<8x32xbf16>, vector<32x96xbf16>, vector<8x96xf32> -> vector<8x96xf32>
    %c0_5 = arith.constant 0 : index
    %c0_6 = arith.constant 0 : index
    %c0_7 = arith.constant 0 : index
    %8 = vector.load %arg7[%c0_5, %c0_6, %c0_7] : memref<1x1x96xf32, #tpu.memory_space<vmem>>, vector<1x1x96xf32>
    %9 = vector.shape_cast %8 : vector<1x1x96xf32> to vector<1x96xf32>
    %10 = vector.broadcast %9 : vector<1x96xf32> to vector<8x96xf32>
    %11 = arith.addf %7, %10 : vector<8x96xf32>
    %12 = vector.extract_strided_slice %11 {offsets = [0, 0], sizes = [8, 8], strides = [1, 1]} : vector<8x96xf32> to vector<8x8xf32>
    %13 = vector.extract_strided_slice %11 {offsets = [0, 32], sizes = [8, 8], strides = [1, 1]} : vector<8x96xf32> to vector<8x8xf32>
    %14 = vector.extract_strided_slice %11 {offsets = [0, 64], sizes = [8, 8], strides = [1, 1]} : vector<8x96xf32> to vector<8x8xf32>
    %15 = vector.shape_cast %12 : vector<8x8xf32> to vector<1x8x8xf32>
    %16 = vector.shape_cast %13 : vector<8x8xf32> to vector<1x8x8xf32>
    %17 = vector.shape_cast %14 : vector<8x8xf32> to vector<1x8x8xf32>
    %18 = arith.truncf %15 : vector<1x8x8xf32> to vector<1x8x8xbf16>
    %19 = arith.truncf %16 : vector<1x8x8xf32> to vector<1x8x8xbf16>
    "tpu.trace_start"() <{level = 10 : i32, message = "bqd,bkd->bqk"}> : () -> ()
    %cst_8 = arith.constant dense<0.000000e+00> : vector<1x8x8xf32>
    %20 = tpu.matmul %18, %19, %cst_8 {dimension_numbers = #tpu.dot_dimension_numbers<[2], [2], [1], [1], [0, 0, 0, 1, 1, 1], [0], [0]>} : vector<1x8x8xbf16>, vector<1x8x8xbf16>, vector<1x8x8xf32> -> vector<1x8x8xf32>
    "tpu.trace_stop"() : () -> ()
    %cst_9 = arith.constant dense<0xFF800000> : vector<1x8xf32>
    %21 = vector.multi_reduction <maximumf>, %20, %cst_9 [2] : vector<1x8x8xf32> to vector<1x8xf32>
    %22 = vector.shape_cast %21 : vector<1x8xf32> to vector<1x8x1xf32>
    %23 = vector.broadcast %22 : vector<1x8x1xf32> to vector<1x8x8xf32>
    %24 = arith.subf %20, %23 : vector<1x8x8xf32>
    %25 = math.exp %24 : vector<1x8x8xf32>
    %cst_10 = arith.constant dense<0.000000e+00> : vector<1x8xf32>
    %26 = vector.multi_reduction <add>, %25, %cst_10 [2] : vector<1x8x8xf32> to vector<1x8xf32>
    %27 = vector.shape_cast %26 : vector<1x8xf32> to vector<1x8x1xf32>
    %28 = tpu.reciprocal %27 {approx = true} : vector<1x8x1xf32> -> vector<1x8x1xf32>
    %29 = vector.broadcast %28 : vector<1x8x1xf32> to vector<1x8x8xf32>
    %30 = arith.mulf %25, %29 : vector<1x8x8xf32>
    %31 = arith.truncf %30 : vector<1x8x8xf32> to vector<1x8x8xbf16>
    %32 = arith.truncf %17 : vector<1x8x8xf32> to vector<1x8x8xbf16>
    "tpu.trace_start"() <{level = 10 : i32, message = "bqk,bkd->bqd"}> : () -> ()
    %cst_11 = arith.constant dense<0.000000e+00> : vector<1x8x8xf32>
    %33 = tpu.matmul %31, %32, %cst_11 {dimension_numbers = #tpu.dot_dimension_numbers<[2], [1], [1], [2], [0, 0, 0, 1, 1, 2], [0], [0]>} : vector<1x8x8xbf16>, vector<1x8x8xbf16>, vector<1x8x8xf32> -> vector<1x8x8xf32>
    "tpu.trace_stop"() : () -> ()
    %34 = vector.shape_cast %33 : vector<1x8x8xf32> to vector<8x8xf32>
    %35 = vector.extract_strided_slice %11 {offsets = [0, 8], sizes = [8, 8], strides = [1, 1]} : vector<8x96xf32> to vector<8x8xf32>
    %36 = vector.extract_strided_slice %11 {offsets = [0, 40], sizes = [8, 8], strides = [1, 1]} : vector<8x96xf32> to vector<8x8xf32>
    %37 = vector.extract_strided_slice %11 {offsets = [0, 72], sizes = [8, 8], strides = [1, 1]} : vector<8x96xf32> to vector<8x8xf32>
    %38 = vector.shape_cast %35 : vector<8x8xf32> to vector<1x8x8xf32>
    %39 = vector.shape_cast %36 : vector<8x8xf32> to vector<1x8x8xf32>
    %40 = vector.shape_cast %37 : vector<8x8xf32> to vector<1x8x8xf32>
    %41 = arith.truncf %38 : vector<1x8x8xf32> to vector<1x8x8xbf16>
    %42 = arith.truncf %39 : vector<1x8x8xf32> to vector<1x8x8xbf16>
    "tpu.trace_start"() <{level = 10 : i32, message = "bqd,bkd->bqk"}> : () -> ()
    %cst_12 = arith.constant dense<0.000000e+00> : vector<1x8x8xf32>
    %43 = tpu.matmul %41, %42, %cst_12 {dimension_numbers = #tpu.dot_dimension_numbers<[2], [2], [1], [1], [0, 0, 0, 1, 1, 1], [0], [0]>} : vector<1x8x8xbf16>, vector<1x8x8xbf16>, vector<1x8x8xf32> -> vector<1x8x8xf32>
    "tpu.trace_stop"() : () -> ()
    %cst_13 = arith.constant dense<0xFF800000> : vector<1x8xf32>
    %44 = vector.multi_reduction <maximumf>, %43, %cst_13 [2] : vector<1x8x8xf32> to vector<1x8xf32>
    %45 = vector.shape_cast %44 : vector<1x8xf32> to vector<1x8x1xf32>
    %46 = vector.broadcast %45 : vector<1x8x1xf32> to vector<1x8x8xf32>
    %47 = arith.subf %43, %46 : vector<1x8x8xf32>
    %48 = math.exp %47 : vector<1x8x8xf32>
    %cst_14 = arith.constant dense<0.000000e+00> : vector<1x8xf32>
    %49 = vector.multi_reduction <add>, %48, %cst_14 [2] : vector<1x8x8xf32> to vector<1x8xf32>
    %50 = vector.shape_cast %49 : vector<1x8xf32> to vector<1x8x1xf32>
    %51 = tpu.reciprocal %50 {approx = true} : vector<1x8x1xf32> -> vector<1x8x1xf32>
    %52 = vector.broadcast %51 : vector<1x8x1xf32> to vector<1x8x8xf32>
    %53 = arith.mulf %48, %52 : vector<1x8x8xf32>
    %54 = arith.truncf %53 : vector<1x8x8xf32> to vector<1x8x8xbf16>
    %55 = arith.truncf %40 : vector<1x8x8xf32> to vector<1x8x8xbf16>
    "tpu.trace_start"() <{level = 10 : i32, message = "bqk,bkd->bqd"}> : () -> ()
    %cst_15 = arith.constant dense<0.000000e+00> : vector<1x8x8xf32>
    %56 = tpu.matmul %54, %55, %cst_15 {dimension_numbers = #tpu.dot_dimension_numbers<[2], [1], [1], [2], [0, 0, 0, 1, 1, 2], [0], [0]>} : vector<1x8x8xbf16>, vector<1x8x8xbf16>, vector<1x8x8xf32> -> vector<1x8x8xf32>
    "tpu.trace_stop"() : () -> ()
    %57 = vector.shape_cast %56 : vector<1x8x8xf32> to vector<8x8xf32>
    %58 = vector.extract_strided_slice %11 {offsets = [0, 16], sizes = [8, 8], strides = [1, 1]} : vector<8x96xf32> to vector<8x8xf32>
    %59 = vector.extract_strided_slice %11 {offsets = [0, 48], sizes = [8, 8], strides = [1, 1]} : vector<8x96xf32> to vector<8x8xf32>
    %60 = vector.extract_strided_slice %11 {offsets = [0, 80], sizes = [8, 8], strides = [1, 1]} : vector<8x96xf32> to vector<8x8xf32>
    %61 = vector.shape_cast %58 : vector<8x8xf32> to vector<1x8x8xf32>
    %62 = vector.shape_cast %59 : vector<8x8xf32> to vector<1x8x8xf32>
    %63 = vector.shape_cast %60 : vector<8x8xf32> to vector<1x8x8xf32>
    %64 = arith.truncf %61 : vector<1x8x8xf32> to vector<1x8x8xbf16>
    %65 = arith.truncf %62 : vector<1x8x8xf32> to vector<1x8x8xbf16>
    "tpu.trace_start"() <{level = 10 : i32, message = "bqd,bkd->bqk"}> : () -> ()
    %cst_16 = arith.constant dense<0.000000e+00> : vector<1x8x8xf32>
    %66 = tpu.matmul %64, %65, %cst_16 {dimension_numbers = #tpu.dot_dimension_numbers<[2], [2], [1], [1], [0, 0, 0, 1, 1, 1], [0], [0]>} : vector<1x8x8xbf16>, vector<1x8x8xbf16>, vector<1x8x8xf32> -> vector<1x8x8xf32>
    "tpu.trace_stop"() : () -> ()
    %cst_17 = arith.constant dense<0xFF800000> : vector<1x8xf32>
    %67 = vector.multi_reduction <maximumf>, %66, %cst_17 [2] : vector<1x8x8xf32> to vector<1x8xf32>
    %68 = vector.shape_cast %67 : vector<1x8xf32> to vector<1x8x1xf32>
    %69 = vector.broadcast %68 : vector<1x8x1xf32> to vector<1x8x8xf32>
    %70 = arith.subf %66, %69 : vector<1x8x8xf32>
    %71 = math.exp %70 : vector<1x8x8xf32>
    %cst_18 = arith.constant dense<0.000000e+00> : vector<1x8xf32>
    %72 = vector.multi_reduction <add>, %71, %cst_18 [2] : vector<1x8x8xf32> to vector<1x8xf32>
    %73 = vector.shape_cast %72 : vector<1x8xf32> to vector<1x8x1xf32>
    %74 = tpu.reciprocal %73 {approx = true} : vector<1x8x1xf32> -> vector<1x8x1xf32>
    %75 = vector.broadcast %74 : vector<1x8x1xf32> to vector<1x8x8xf32>
    %76 = arith.mulf %71, %75 : vector<1x8x8xf32>
    %77 = arith.truncf %76 : vector<1x8x8xf32> to vector<1x8x8xbf16>
    %78 = arith.truncf %63 : vector<1x8x8xf32> to vector<1x8x8xbf16>
    "tpu.trace_start"() <{level = 10 : i32, message = "bqk,bkd->bqd"}> : () -> ()
    %cst_19 = arith.constant dense<0.000000e+00> : vector<1x8x8xf32>
    %79 = tpu.matmul %77, %78, %cst_19 {dimension_numbers = #tpu.dot_dimension_numbers<[2], [1], [1], [2], [0, 0, 0, 1, 1, 2], [0], [0]>} : vector<1x8x8xbf16>, vector<1x8x8xbf16>, vector<1x8x8xf32> -> vector<1x8x8xf32>
    "tpu.trace_stop"() : () -> ()
    %80 = vector.shape_cast %79 : vector<1x8x8xf32> to vector<8x8xf32>
    %81 = vector.extract_strided_slice %11 {offsets = [0, 24], sizes = [8, 8], strides = [1, 1]} : vector<8x96xf32> to vector<8x8xf32>
    %82 = vector.extract_strided_slice %11 {offsets = [0, 56], sizes = [8, 8], strides = [1, 1]} : vector<8x96xf32> to vector<8x8xf32>
    %83 = vector.extract_strided_slice %11 {offsets = [0, 88], sizes = [8, 8], strides = [1, 1]} : vector<8x96xf32> to vector<8x8xf32>
    %84 = vector.shape_cast %81 : vector<8x8xf32> to vector<1x8x8xf32>
    %85 = vector.shape_cast %82 : vector<8x8xf32> to vector<1x8x8xf32>
    %86 = vector.shape_cast %83 : vector<8x8xf32> to vector<1x8x8xf32>
    %87 = arith.truncf %84 : vector<1x8x8xf32> to vector<1x8x8xbf16>
    %88 = arith.truncf %85 : vector<1x8x8xf32> to vector<1x8x8xbf16>
    "tpu.trace_start"() <{level = 10 : i32, message = "bqd,bkd->bqk"}> : () -> ()
    %cst_20 = arith.constant dense<0.000000e+00> : vector<1x8x8xf32>
    %89 = tpu.matmul %87, %88, %cst_20 {dimension_numbers = #tpu.dot_dimension_numbers<[2], [2], [1], [1], [0, 0, 0, 1, 1, 1], [0], [0]>} : vector<1x8x8xbf16>, vector<1x8x8xbf16>, vector<1x8x8xf32> -> vector<1x8x8xf32>
    "tpu.trace_stop"() : () -> ()
    %cst_21 = arith.constant dense<0xFF800000> : vector<1x8xf32>
    %90 = vector.multi_reduction <maximumf>, %89, %cst_21 [2] : vector<1x8x8xf32> to vector<1x8xf32>
    %91 = vector.shape_cast %90 : vector<1x8xf32> to vector<1x8x1xf32>
    %92 = vector.broadcast %91 : vector<1x8x1xf32> to vector<1x8x8xf32>
    %93 = arith.subf %89, %92 : vector<1x8x8xf32>
    %94 = math.exp %93 : vector<1x8x8xf32>
    %cst_22 = arith.constant dense<0.000000e+00> : vector<1x8xf32>
    %95 = vector.multi_reduction <add>, %94, %cst_22 [2] : vector<1x8x8xf32> to vector<1x8xf32>
    %96 = vector.shape_cast %95 : vector<1x8xf32> to vector<1x8x1xf32>
    %97 = tpu.reciprocal %96 {approx = true} : vector<1x8x1xf32> -> vector<1x8x1xf32>
    %98 = vector.broadcast %97 : vector<1x8x1xf32> to vector<1x8x8xf32>
    %99 = arith.mulf %94, %98 : vector<1x8x8xf32>
    %100 = arith.truncf %99 : vector<1x8x8xf32> to vector<1x8x8xbf16>
    %101 = arith.truncf %86 : vector<1x8x8xf32> to vector<1x8x8xbf16>
    "tpu.trace_start"() <{level = 10 : i32, message = "bqk,bkd->bqd"}> : () -> ()
    %cst_23 = arith.constant dense<0.000000e+00> : vector<1x8x8xf32>
    %102 = tpu.matmul %100, %101, %cst_23 {dimension_numbers = #tpu.dot_dimension_numbers<[2], [1], [1], [2], [0, 0, 0, 1, 1, 2], [0], [0]>} : vector<1x8x8xbf16>, vector<1x8x8xbf16>, vector<1x8x8xf32> -> vector<1x8x8xf32>
    "tpu.trace_stop"() : () -> ()
    %103 = vector.shape_cast %102 : vector<1x8x8xf32> to vector<8x8xf32>
    %104 = tpu.concatenate %34, %57, %80, %103 in 1 : vector<8x8xf32>, vector<8x8xf32>, vector<8x8xf32>, vector<8x8xf32> -> vector<8x32xf32>
    %105 = arith.truncf %104 : vector<8x32xf32> to vector<8x32xbf16>
    %c0_24 = arith.constant 0 : index
    %c0_25 = arith.constant 0 : index
    %c0_26 = arith.constant 0 : index
    %106 = vector.load %arg8[%c0_24, %c0_25, %c0_26] : memref<1x32x32xbf16, #tpu.memory_space<vmem>>, vector<1x32x32xbf16>
    %107 = vector.shape_cast %106 : vector<1x32x32xbf16> to vector<32x32xbf16>
    %cst_27 = arith.constant dense<0.000000e+00> : vector<8x32xf32>
    %108 = tpu.matmul %105, %107, %cst_27 {dimension_numbers = #tpu.dot_dimension_numbers<[1], [0], [0], [1], [0, 0, 1, 1], [], []>} : vector<8x32xbf16>, vector<32x32xbf16>, vector<8x32xf32> -> vector<8x32xf32>
    %c0_28 = arith.constant 0 : index
    %c0_29 = arith.constant 0 : index
    %c0_30 = arith.constant 0 : index
    %109 = vector.load %arg9[%c0_28, %c0_29, %c0_30] : memref<1x1x32xf32, #tpu.memory_space<vmem>>, vector<1x1x32xf32>
    %110 = vector.shape_cast %109 : vector<1x1x32xf32> to vector<1x32xf32>
    %111 = vector.broadcast %110 : vector<1x32xf32> to vector<8x32xf32>
    %112 = arith.addf %108, %111 : vector<8x32xf32>
    %113 = arith.addf %3, %112 : vector<8x32xf32>
    %c0_31 = arith.constant 0 : index
    %c0_32 = arith.constant 0 : index
    %c0_33 = arith.constant 0 : index
    %114 = vector.load %arg14[%c0_31, %c0_32, %c0_33] : memref<1x1x32xf32, #tpu.memory_space<vmem>>, vector<1x1x32xf32>
    %115 = vector.shape_cast %114 : vector<1x1x32xf32> to vector<1x32xf32>
    %c0_34 = arith.constant 0 : index
    %c0_35 = arith.constant 0 : index
    %c0_36 = arith.constant 0 : index
    %116 = vector.load %arg15[%c0_34, %c0_35, %c0_36] : memref<1x1x32xf32, #tpu.memory_space<vmem>>, vector<1x1x32xf32>
    %117 = vector.shape_cast %116 : vector<1x1x32xf32> to vector<1x32xf32>
    %cst_37 = arith.constant dense<0.000000e+00> : vector<8xf32>
    %118 = vector.multi_reduction <add>, %113, %cst_37 [1] : vector<8x32xf32> to vector<8xf32>
    %119 = vector.shape_cast %118 : vector<8xf32> to vector<8x1xf32>
    %cst_38 = arith.constant 3.200000e+01 : f32
    %120 = vector.broadcast %cst_38 : f32 to vector<8x1xf32>
    %121 = arith.divf %119, %120 : vector<8x1xf32>
    %122 = vector.broadcast %121 : vector<8x1xf32> to vector<8x32xf32>
    %123 = arith.subf %113, %122 : vector<8x32xf32>
    %124 = arith.mulf %123, %123 : vector<8x32xf32>
    %cst_39 = arith.constant dense<0.000000e+00> : vector<8xf32>
    %125 = vector.multi_reduction <add>, %124, %cst_39 [1] : vector<8x32xf32> to vector<8xf32>
    %126 = vector.shape_cast %125 : vector<8xf32> to vector<8x1xf32>
    %cst_40 = arith.constant 3.200000e+01 : f32
    %127 = vector.broadcast %cst_40 : f32 to vector<8x1xf32>
    %128 = arith.divf %126, %127 : vector<8x1xf32>
    %129 = vector.broadcast %121 : vector<8x1xf32> to vector<8x32xf32>
    %130 = arith.subf %113, %129 : vector<8x32xf32>
    %cst_41 = arith.constant 9.99999974E-6 : f32
    %131 = vector.broadcast %cst_41 : f32 to vector<8x1xf32>
    %132 = arith.addf %128, %131 : vector<8x1xf32>
    %133 = math.rsqrt %132 : vector<8x1xf32>
    %134 = vector.broadcast %133 : vector<8x1xf32> to vector<8x32xf32>
    %135 = arith.mulf %130, %134 : vector<8x32xf32>
    %136 = vector.broadcast %115 : vector<1x32xf32> to vector<8x32xf32>
    %137 = arith.mulf %135, %136 : vector<8x32xf32>
    %138 = vector.broadcast %117 : vector<1x32xf32> to vector<8x32xf32>
    %139 = arith.addf %137, %138 : vector<8x32xf32>
    %140 = arith.truncf %139 : vector<8x32xf32> to vector<8x32xbf16>
    %c0_42 = arith.constant 0 : index
    %c0_43 = arith.constant 0 : index
    %c0_44 = arith.constant 0 : index
    %141 = vector.load %arg10[%c0_42, %c0_43, %c0_44] : memref<1x32x64xbf16, #tpu.memory_space<vmem>>, vector<1x32x64xbf16>
    %142 = vector.shape_cast %141 : vector<1x32x64xbf16> to vector<32x64xbf16>
    %cst_45 = arith.constant dense<0.000000e+00> : vector<8x64xf32>
    %143 = tpu.matmul %140, %142, %cst_45 {dimension_numbers = #tpu.dot_dimension_numbers<[1], [0], [0], [1], [0, 0, 1, 1], [], []>} : vector<8x32xbf16>, vector<32x64xbf16>, vector<8x64xf32> -> vector<8x64xf32>
    %c0_46 = arith.constant 0 : index
    %c0_47 = arith.constant 0 : index
    %c0_48 = arith.constant 0 : index
    %144 = vector.load %arg11[%c0_46, %c0_47, %c0_48] : memref<1x1x64xf32, #tpu.memory_space<vmem>>, vector<1x1x64xf32>
    %145 = vector.shape_cast %144 : vector<1x1x64xf32> to vector<1x64xf32>
    %146 = vector.broadcast %145 : vector<1x64xf32> to vector<8x64xf32>
    %147 = arith.addf %143, %146 : vector<8x64xf32>
    %cst_49 = arith.constant 0.000000e+00 : f32
    %148 = vector.broadcast %cst_49 : f32 to vector<8x64xf32>
    %149 = arith.maximumf %147, %148 : vector<8x64xf32>
    %150 = arith.truncf %149 : vector<8x64xf32> to vector<8x64xbf16>
    %c0_50 = arith.constant 0 : index
    %c0_51 = arith.constant 0 : index
    %c0_52 = arith.constant 0 : index
    %151 = vector.load %arg12[%c0_50, %c0_51, %c0_52] : memref<1x64x32xbf16, #tpu.memory_space<vmem>>, vector<1x64x32xbf16>
    %152 = vector.shape_cast %151 : vector<1x64x32xbf16> to vector<64x32xbf16>
    %cst_53 = arith.constant dense<0.000000e+00> : vector<8x32xf32>
    %153 = tpu.matmul %150, %152, %cst_53 {dimension_numbers = #tpu.dot_dimension_numbers<[1], [0], [0], [1], [0, 0, 1, 1], [], []>} : vector<8x64xbf16>, vector<64x32xbf16>, vector<8x32xf32> -> vector<8x32xf32>
    %c0_54 = arith.constant 0 : index
    %c0_55 = arith.constant 0 : index
    %c0_56 = arith.constant 0 : index
    %154 = vector.load %arg13[%c0_54, %c0_55, %c0_56] : memref<1x1x32xf32, #tpu.memory_space<vmem>>, vector<1x1x32xf32>
    %155 = vector.shape_cast %154 : vector<1x1x32xf32> to vector<1x32xf32>
    %156 = vector.broadcast %155 : vector<1x32xf32> to vector<8x32xf32>
    %157 = arith.addf %153, %156 : vector<8x32xf32>
    %158 = arith.addf %139, %157 : vector<8x32xf32>
    %c0_57 = arith.constant 0 : index
    %c0_58 = arith.constant 0 : index
    %c0_59 = arith.constant 0 : index
    %159 = vector.load %arg16[%c0_57, %c0_58, %c0_59] : memref<1x1x32xf32, #tpu.memory_space<vmem>>, vector<1x1x32xf32>
    %160 = vector.shape_cast %159 : vector<1x1x32xf32> to vector<1x32xf32>
    %c0_60 = arith.constant 0 : index
    %c0_61 = arith.constant 0 : index
    %c0_62 = arith.constant 0 : index
    %161 = vector.load %arg17[%c0_60, %c0_61, %c0_62] : memref<1x1x32xf32, #tpu.memory_space<vmem>>, vector<1x1x32xf32>
    %162 = vector.shape_cast %161 : vector<1x1x32xf32> to vector<1x32xf32>
    %cst_63 = arith.constant dense<0.000000e+00> : vector<8xf32>
    %163 = vector.multi_reduction <add>, %158, %cst_63 [1] : vector<8x32xf32> to vector<8xf32>
    %164 = vector.shape_cast %163 : vector<8xf32> to vector<8x1xf32>
    %cst_64 = arith.constant 3.200000e+01 : f32
    %165 = vector.broadcast %cst_64 : f32 to vector<8x1xf32>
    %166 = arith.divf %164, %165 : vector<8x1xf32>
    %167 = vector.broadcast %166 : vector<8x1xf32> to vector<8x32xf32>
    %168 = arith.subf %158, %167 : vector<8x32xf32>
    %169 = arith.mulf %168, %168 : vector<8x32xf32>
    %cst_65 = arith.constant dense<0.000000e+00> : vector<8xf32>
    %170 = vector.multi_reduction <add>, %169, %cst_65 [1] : vector<8x32xf32> to vector<8xf32>
    %171 = vector.shape_cast %170 : vector<8xf32> to vector<8x1xf32>
    %cst_66 = arith.constant 3.200000e+01 : f32
    %172 = vector.broadcast %cst_66 : f32 to vector<8x1xf32>
    %173 = arith.divf %171, %172 : vector<8x1xf32>
    %174 = vector.broadcast %166 : vector<8x1xf32> to vector<8x32xf32>
    %175 = arith.subf %158, %174 : vector<8x32xf32>
    %cst_67 = arith.constant 9.99999974E-6 : f32
    %176 = vector.broadcast %cst_67 : f32 to vector<8x1xf32>
    %177 = arith.addf %173, %176 : vector<8x1xf32>
    %178 = math.rsqrt %177 : vector<8x1xf32>
    %179 = vector.broadcast %178 : vector<8x1xf32> to vector<8x32xf32>
    %180 = arith.mulf %175, %179 : vector<8x32xf32>
    %181 = vector.broadcast %160 : vector<1x32xf32> to vector<8x32xf32>
    %182 = arith.mulf %180, %181 : vector<8x32xf32>
    %183 = vector.broadcast %162 : vector<1x32xf32> to vector<8x32xf32>
    %184 = arith.addf %182, %183 : vector<8x32xf32>
    %c0_68 = arith.constant 0 : index
    %c0_69 = arith.constant 0 : index
    %185 = vector.load %arg19[%c0_68, %c0_69] : memref<8x32xf32, #tpu.memory_space<vmem>>, vector<8x32xf32>
    tpu.vector_store %arg19[%c0_68, %c0_69], %184 {strides = array<i32>} : memref<8x32xf32, #tpu.memory_space<vmem>>, vector<8x32xf32>,
    %c1_i32 = arith.constant 1 : i32
    %186 = arith.cmpi eq, %arg1, %c1_i32 : i32
    %187 = arith.extui %186 : i1 to i32
    %c0_i32_70 = arith.constant 0 : i32
    %188 = arith.cmpi ne, %187, %c0_i32_70 : i32
    scf.if %188 {
      %c0_71 = arith.constant 0 : index
      %c0_72 = arith.constant 0 : index
      %189 = vector.load %arg19[%c0_71, %c0_72] : memref<8x32xf32, #tpu.memory_space<vmem>>, vector<8x32xf32>
      %190 = vector.shape_cast %189 : vector<8x32xf32> to vector<1x8x32xf32>
      %191 = vector.extract_strided_slice %190 {offsets = [0, 7, 0], sizes = [1, 1, 32], strides = [1, 1, 1]} : vector<1x8x32xf32> to vector<1x1x32xf32>
      %192 = vector.shape_cast %191 : vector<1x1x32xf32> to vector<1x32xf32>
      %cst_73 = arith.constant 0.000000e+00 : f32
      %193 = vector.broadcast %cst_73 : f32 to vector<1x96xf32>
      %194 = tpu.concatenate %192, %193 in 1 : vector<1x32xf32>, vector<1x96xf32> -> vector<1x128xf32>
      %c0_74 = arith.constant 0 : index
      %c0_75 = arith.constant 0 : index
      %c0_76 = arith.constant 0 : index
      %195 = vector.load %arg18[%c0_74, %c0_75, %c0_76] : memref<1x1x128xf32, #tpu.memory_space<vmem>>, vector<1x1x128xf32>
      %196 = vector.shape_cast %195 : vector<1x1x128xf32> to vector<1x128xf32>
      %197 = vector.shape_cast %194 : vector<1x128xf32> to vector<1x1x128xf32>
      tpu.vector_store %arg18[%c0_74, %c0_75, %c0_76], %197 {strides = array<i32>} : memref<1x1x128xf32, #tpu.memory_space<vmem>>, vector<1x1x128xf32>,
    } else {
    }
    return
  }
  func.func @transform_0(%arg0: i32, %arg1: i32) -> (i32, i32, i32) {
    %c0_i32 = arith.constant 0 : i32
    %c0_i32_0 = arith.constant 0 : i32
    %c0_i32_1 = arith.constant 0 : i32
    return %arg0, %c0_i32, %c0_i32_0 : i32, i32, i32
  }
  func.func @transform_1(%arg0: i32, %arg1: i32) -> (i32, i32, i32) {
    %c0_i32 = arith.constant 0 : i32
    %c0_i32_0 = arith.constant 0 : i32
    %c0_i32_1 = arith.constant 0 : i32
    return %arg0, %c0_i32, %c0_i32_0 : i32, i32, i32
  }
  func.func @transform_2(%arg0: i32, %arg1: i32) -> (i32, i32) {
    %c0_i32 = arith.constant 0 : i32
    %c0_i32_0 = arith.constant 0 : i32
    %c0_i32_1 = arith.constant 0 : i32
    return %c0_i32, %c0_i32_0 : i32, i32
  }
  func.func @transform_3(%arg0: i32, %arg1: i32) -> (i32, i32) {
    %c0_i32 = arith.constant 0 : i32
    %c0_i32_0 = arith.constant 0 : i32
    %c0_i32_1 = arith.constant 0 : i32
    return %c0_i32, %c0_i32_0 : i32, i32
  }
  func.func @transform_4(%arg0: i32, %arg1: i32) -> (i32, i32, i32) {
    %c0_i32 = arith.constant 0 : i32
    %c0_i32_0 = arith.constant 0 : i32
    %c0_i32_1 = arith.constant 0 : i32
    return %arg1, %c0_i32, %c0_i32_0 : i32, i32, i32
  }
  func.func @transform_5(%arg0: i32, %arg1: i32) -> (i32, i32, i32) {
    %c0_i32 = arith.constant 0 : i32
    %c0_i32_0 = arith.constant 0 : i32
    %c0_i32_1 = arith.constant 0 : i32
    return %arg1, %c0_i32, %c0_i32_0 : i32, i32, i32
  }
  func.func @transform_6(%arg0: i32, %arg1: i32) -> (i32, i32, i32) {
    %c0_i32 = arith.constant 0 : i32
    %c0_i32_0 = arith.constant 0 : i32
    %c0_i32_1 = arith.constant 0 : i32
    return %arg1, %c0_i32, %c0_i32_0 : i32, i32, i32
  }
  func.func @transform_7(%arg0: i32, %arg1: i32) -> (i32, i32, i32) {
    %c0_i32 = arith.constant 0 : i32
    %c0_i32_0 = arith.constant 0 : i32
    %c0_i32_1 = arith.constant 0 : i32
    return %arg1, %c0_i32, %c0_i32_0 : i32, i32, i32
  }
  func.func @transform_8(%arg0: i32, %arg1: i32) -> (i32, i32, i32) {
    %c0_i32 = arith.constant 0 : i32
    %c0_i32_0 = arith.constant 0 : i32
    %c0_i32_1 = arith.constant 0 : i32
    return %arg1, %c0_i32, %c0_i32_0 : i32, i32, i32
  }
  func.func @transform_9(%arg0: i32, %arg1: i32) -> (i32, i32, i32) {
    %c0_i32 = arith.constant 0 : i32
    %c0_i32_0 = arith.constant 0 : i32
    %c0_i32_1 = arith.constant 0 : i32
    return %arg1, %c0_i32, %c0_i32_0 : i32, i32, i32
  }
  func.func @transform_10(%arg0: i32, %arg1: i32) -> (i32, i32, i32) {
    %c0_i32 = arith.constant 0 : i32
    %c0_i32_0 = arith.constant 0 : i32
    %c0_i32_1 = arith.constant 0 : i32
    return %arg1, %c0_i32, %c0_i32_0 : i32, i32, i32
  }
  func.func @transform_11(%arg0: i32, %arg1: i32) -> (i32, i32, i32) {
    %c0_i32 = arith.constant 0 : i32
    %c0_i32_0 = arith.constant 0 : i32
    %c0_i32_1 = arith.constant 0 : i32
    return %arg1, %c0_i32, %c0_i32_0 : i32, i32, i32
  }
  func.func @transform_12(%arg0: i32, %arg1: i32) -> (i32, i32, i32) {
    %c0_i32 = arith.constant 0 : i32
    %c0_i32_0 = arith.constant 0 : i32
    %c0_i32_1 = arith.constant 0 : i32
    return %arg1, %c0_i32, %c0_i32_0 : i32, i32, i32
  }
  func.func @transform_13(%arg0: i32, %arg1: i32) -> (i32, i32, i32) {
    %c0_i32 = arith.constant 0 : i32
    %c0_i32_0 = arith.constant 0 : i32
    %c0_i32_1 = arith.constant 0 : i32
    return %arg1, %c0_i32, %c0_i32_0 : i32, i32, i32
  }
  func.func @transform_14(%arg0: i32, %arg1: i32) -> (i32, i32, i32) {
    %c0_i32 = arith.constant 0 : i32
    %c0_i32_0 = arith.constant 0 : i32
    %c0_i32_1 = arith.constant 0 : i32
    return %arg1, %c0_i32, %c0_i32_0 : i32, i32, i32
  }
  func.func @transform_15(%arg0: i32, %arg1: i32) -> (i32, i32, i32) {
    %c0_i32 = arith.constant 0 : i32
    %c0_i32_0 = arith.constant 0 : i32
    %c0_i32_1 = arith.constant 0 : i32
    return %arg1, %c0_i32, %c0_i32_0 : i32, i32, i32
  }
  func.func @transform_16(%arg0: i32, %arg1: i32) -> (i32, i32, i32) {
    %c0_i32 = arith.constant 0 : i32
    %c0_i32_0 = arith.constant 0 : i32
    %c0_i32_1 = arith.constant 0 : i32
    return %arg0, %c0_i32, %c0_i32_0 : i32, i32, i32
  }
}

</mosaic_0001>

<llo_original>
// kernel: tpu_custom_call.1
$region0: #{tpu_custom_call.1}
  #allocation0 [shape = 'u32[]', space=smem, size = 0x4, offset = 0x4, fixed_abs, tag = 'smem constant byte address 0x4 - core index']
  #allocation1 [shape = 'u32[72,128]{1,0:T(1,128)}', space=vmem, size = 0x9000, scoped, tag = 'internal scratch']
  #allocation2 [shape = 'f32[8,32]{1,0:T(8,128)}', space=vmem, size = 0x1000, scoped, tag = 'scratch operand']
  %s0 = inlined_call_operand.vmem [shape: f32[2,8,4], index: 0, kind: input, shape index: {}]
  %s1 = inlined_call_operand.hbm [shape: f32[2,1,32], index: 1, kind: input, shape index: {}]
  %s2 = inlined_call_operand.hbm [shape: bf16[4,32], index: 2, kind: input, shape index: {}]
  %s3 = inlined_call_operand.vmem [shape: f32[1,32], index: 3, kind: input, shape index: {}]
  %s4 = inlined_call_operand.vmem [shape: bf16[2,32,96], index: 4, kind: input, shape index: {}]
  %s5 = inlined_call_operand.hbm [shape: f32[2,1,96], index: 5, kind: input, shape index: {}]
  %s6 = inlined_call_operand.vmem [shape: bf16[2,32,32], index: 6, kind: input, shape index: {}]
  %s7 = inlined_call_operand.hbm [shape: f32[2,1,32], index: 7, kind: input, shape index: {}]
  %s8 = inlined_call_operand.vmem [shape: bf16[2,32,64], index: 8, kind: input, shape index: {}]
  %s9 = inlined_call_operand.hbm [shape: f32[2,1,64], index: 9, kind: input, shape index: {}]
  %s10 = inlined_call_operand.vmem [shape: bf16[2,64,32], index: 10, kind: input, shape index: {}]
  %s11 = inlined_call_operand.hbm [shape: f32[2,1,32], index: 11, kind: input, shape index: {}]
  %s12 = inlined_call_operand.vmem [shape: f32[2,1,32], index: 12, kind: input, shape index: {}]
  %s13 = inlined_call_operand.hbm [shape: f32[2,1,32], index: 13, kind: input, shape index: {}]
  %s14 = inlined_call_operand.vmem [shape: f32[2,1,32], index: 14, kind: input, shape index: {}]
  %s15 = inlined_call_operand.hbm [shape: f32[2,1,32], index: 15, kind: input, shape index: {}]
  %s16 = inlined_call_operand.hbm [shape: f32[2,1,128], index: 16, kind: output, shape index: {}]
  %s17 = sld [smem:[#allocation0]]
  $region137: #{tpu_custom_call.1} parent=0
    _
  %s19 = ssub.s32 1, %s17
  %s20 = scalar_select 0, %s19, %s17
  $region1: #{tpu_custom_call.1} parent=0
    #allocation3 [shape = 'u8[1024]{0}', space=vmem, size = 0x400, scoped, tag = 'input window, operand 1']
    #allocation4 [shape = 's32[2]{0}', space=sflag, size = 0x8, scoped, tag = 'scoped memory for tpu_custom_call.1']
    #allocation5 [shape = 's32[2]{0}', space=sflag, size = 0x8, scoped, tag = 'scoped memory for tpu_custom_call.1']
    #allocation6 [shape = 'u8[1024]{0}', space=vmem, size = 0x400, scoped, tag = 'input window, operand 2, single buffered']
    #allocation7 [shape = 's32[1]{0}', space=sflag, size = 0x4, scoped, tag = 'scoped memory for tpu_custom_call.1']
    #allocation8 [shape = 'u8[1024]{0}', space=vmem, size = 0x400, scoped, tag = 'input window, operand 5']
    #allocation9 [shape = 'u8[1024]{0}', space=vmem, size = 0x400, scoped, tag = 'input window, operand 7']
    #allocation10 [shape = 'u8[1024]{0}', space=vmem, size = 0x400, scoped, tag = 'input window, operand 9']
    #allocation11 [shape = 'u8[1024]{0}', space=vmem, size = 0x400, scoped, tag = 'input window, operand 11']
    #allocation12 [shape = 'u8[1024]{0}', space=vmem, size = 0x400, scoped, tag = 'input window, operand 13']
    #allocation13 [shape = 'u8[1024]{0}', space=vmem, size = 0x400, scoped, tag = 'input window, operand 15']
    #allocation14 [shape = 'u8[1024]{0}', space=vmem, size = 0x400, scoped, tag = 'output window, operand 0']
    %21 = vsyncpa [#allocation4], 0
    %s22 = scalar_lea.sflag [#allocation4], 1
    %23 = vsyncpa %s22, 0
    %24 = vsyncpa [#allocation7], 0
    %25 = vsyncpa [#allocation5], 0
    %s26 = scalar_lea.sflag [#allocation5], 1
    %27 = vsyncpa %s26, 0
    loop: start=0, step=1, limit=6
    $region2: #{tpu_custom_call.1} parent=1 // loop_pre_header
      _
    $region3: #{tpu_custom_call.1} parent=1 // loop_header
      %s29 = sphi 0, %s33
      %p30 = scmp.ge.s32.totalorder %s29, 6
      %s36 = sphi 0, %s48
      %s37 = sphi 0, %s44
      %s38 = sphi 0, %s36
      %s39 = sphi 0, %s37
      %s40 = sphi 0, %s38
      %s41 = sphi 0, %s39
      %s51 = sphi 0, %s53
      %s54 = sphi 0, %s51
      %s55 = sphi 0, %s54
      %s71 = sphi 0, %s55
      %s77 = sphi 0, %s79
      %s80 = sphi 0, %s77
      %s81 = sphi 0, %s80
      %s97 = sphi 0, %s81
      %s101 = sphi 0, %s101
      %s103 = sphi 0, %s101
      %s104 = sphi 0, %s103
      %s118 = sphi 0, %s104
      %s122 = sphi 0, %s122
      %s124 = sphi 0, %s122
      %s125 = sphi 0, %s124
      %s139 = sphi 0, %s125
      %s145 = sphi 0, %s147
      %s148 = sphi 0, %s145
      %s149 = sphi 0, %s148
      %s165 = sphi 0, %s149
      %s171 = sphi 0, %s173
      %s174 = sphi 0, %s171
      %s175 = sphi 0, %s174
      %s191 = sphi 0, %s175
      %s197 = sphi 0, %s199
      %s200 = sphi 0, %s197
      %s201 = sphi 0, %s200
      %s217 = sphi 0, %s201
      %s223 = sphi 0, %s225
      %s226 = sphi 0, %s223
      %s227 = sphi 0, %s226
      %s243 = sphi 0, %s227
      %s249 = sphi 0, %s251
      %s252 = sphi 0, %s249
      %s253 = sphi 0, %s252
      %s269 = sphi 0, %s253
      %s275 = sphi 0, %s277
      %s278 = sphi 0, %s275
      %s279 = sphi 0, %s278
      %s295 = sphi 0, %s279
      %s301 = sphi 0, %s303
      %s304 = sphi 0, %s301
      %s305 = sphi 0, %s304
      %s321 = sphi 0, %s305
      %s327 = sphi 0, %s329
      %s330 = sphi 0, %s327
      %s331 = sphi 0, %s330
      %s347 = sphi 0, %s331
      %s353 = sphi 0, %s355
      %s356 = sphi 0, %s353
      %s357 = sphi 0, %s356
      %s373 = sphi 0, %s357
      %s379 = sphi 0, %s381
      %s382 = sphi 0, %s379
      %s383 = sphi 0, %s382
      %s399 = sphi 0, %s383
      %s405 = sphi 0, %s407
      %s408 = sphi 0, %s405
      %s409 = sphi 0, %s408
      %s425 = sphi 0, %s409
      %s431 = sphi 0, %s433
      %s434 = sphi 0, %s431
      %s435 = sphi 0, %s434
      %s451 = sphi 0, %s435
      %s457 = sphi 0, %s459
      %s460 = sphi 0, %s457
      %s461 = sphi 0, %s460
      %s477 = sphi 0, %s461
    $region4: #{tpu_custom_call.1} parent=1 // loop_header_branch
      %32 = sbr.rel (%p30) target = $region8
    $region5: #{tpu_custom_call.1} parent=1 // loop_body
      %s34 = ssub.s32 %s29, 1
      %s35 = ssub.s32 %s29, 2
      %s42 = sadd.s32 1, %s37
      %p43 = scmp.ge.s32.totalorder %s42, 2
      %s44 = scalar_select %p43, 0, %s42
      %s45 = sadd.s32 1, %s36
      %s46 = scalar_select %p43, %s45, %s36
      %p47 = scmp.ge.s32.totalorder %s46, 2
      %s48 = scalar_select %p47, 0, %s46
      %s49 = ssub.s32 %s36, %s48
      %p50 = scmp.eq.s32.totalorder %s49, 0
      %s52 = sadd.s32 %s51, 1
      %s53 = scalar_select %p50, %s51, %s52
      %p56 = pneg %p50
      %p57 = scmp.eq.s32.totalorder %s29, 3
      %p58 = por %p56, %p57
      %p59 = scmp.ne.s32.totalorder %s51, %s54
      %p60 = scmp.eq.s32.totalorder %s29, 0
      %p61 = por %p59, %p60
      %p62 = scmp.ne.s32.totalorder %s51, %s54
      %p63 = scmp.eq.s32.totalorder %s34, 3
      %p64 = por %p62, %p63
      %p65 = scmp.ne.s32.totalorder %s54, %s55
      %p66 = scmp.eq.s32.totalorder %s34, 0
      %p67 = por %p65, %p66
      %p68 = scmp.ne.s32.totalorder %s54, %s55
      %p69 = scmp.eq.s32.totalorder %s35, 3
      %p70 = por %p68, %p69
      %p72 = scmp.ne.s32.totalorder %s55, %s71
      %p73 = scmp.eq.s32.totalorder %s35, 0
      %p74 = por %p72, %p73
      %s75 = ssub.s32 %s36, %s48
      %p76 = scmp.eq.s32.totalorder %s75, 0
      %s78 = sadd.s32 %s77, 1
      %s79 = scalar_select %p76, %s77, %s78
      %p82 = pneg %p76
      %p83 = scmp.eq.s32.totalorder %s29, 3
      %p84 = por %p82, %p83
      %p85 = scmp.ne.s32.totalorder %s77, %s80
      %p86 = scmp.eq.s32.totalorder %s29, 0
      %p87 = por %p85, %p86
      %p88 = scmp.ne.s32.totalorder %s77, %s80
      %p89 = scmp.eq.s32.totalorder %s34, 3
      %p90 = por %p88, %p89
      %p91 = scmp.ne.s32.totalorder %s80, %s81
      %p92 = scmp.eq.s32.totalorder %s34, 0
      %p93 = por %p91, %p92
      %p94 = scmp.ne.s32.totalorder %s80, %s81
      %p95 = scmp.eq.s32.totalorder %s35, 3
      %p96 = por %p94, %p95
      %p98 = scmp.ne.s32.totalorder %s81, %s97
      %p99 = scmp.eq.s32.totalorder %s35, 0
      %p100 = por %p98, %p99
      %s102 = sadd.s32 %s101, 1
      %p105 = scmp.eq.s32.totalorder %s29, 3
      %p106 = scmp.ne.s32.totalorder %s101, %s103
      %p107 = scmp.eq.s32.totalorder %s29, 0
      %p108 = por %p106, %p107
      %p109 = scmp.ne.s32.totalorder %s101, %s103
      %p110 = scmp.eq.s32.totalorder %s34, 3
      %p111 = por %p109, %p110
      %p112 = scmp.ne.s32.totalorder %s103, %s104
      %p113 = scmp.eq.s32.totalorder %s34, 0
      %p114 = por %p112, %p113
      %p115 = scmp.ne.s32.totalorder %s103, %s104
      %p116 = scmp.eq.s32.totalorder %s35, 3
      %p117 = por %p115, %p116
      %p119 = scmp.ne.s32.totalorder %s104, %s118
      %p120 = scmp.eq.s32.totalorder %s35, 0
      %p121 = por %p119, %p120
      %s123 = sadd.s32 %s122, 1
      %p126 = scmp.eq.s32.totalorder %s29, 3
      %p127 = scmp.ne.s32.totalorder %s122, %s124
      %p128 = scmp.eq.s32.totalorder %s29, 0
      %p129 = por %p127, %p128
      %p130 = scmp.ne.s32.totalorder %s122, %s124
      %p131 = scmp.eq.s32.totalorder %s34, 3
      %p132 = por %p130, %p131
      %p133 = scmp.ne.s32.totalorder %s124, %s125
      %p134 = scmp.eq.s32.totalorder %s34, 0
      %p135 = por %p133, %p134
      %p136 = scmp.ne.s32.totalorder %s124, %s125
      %p137 = scmp.eq.s32.totalorder %s35, 3
      %p138 = por %p136, %p137
      %p140 = scmp.ne.s32.totalorder %s125, %s139
      %p141 = scmp.eq.s32.totalorder %s35, 0
      %p142 = por %p140, %p141
      %s143 = ssub.s32 %s37, %s44
      %p144 = scmp.eq.s32.totalorder %s143, 0
      %s146 = sadd.s32 %s145, 1
      %s147 = scalar_select %p144, %s145, %s146
      %p150 = pneg %p144
      %p151 = scmp.eq.s32.totalorder %s29, 3
      %p152 = por %p150, %p151
      %p153 = scmp.ne.s32.totalorder %s145, %s148
      %p154 = scmp.eq.s32.totalorder %s29, 0
      %p155 = por %p153, %p154
      %p156 = scmp.ne.s32.totalorder %s145, %s148
      %p157 = scmp.eq.s32.totalorder %s34, 3
      %p158 = por %p156, %p157
      %p159 = scmp.ne.s32.totalorder %s148, %s149
      %p160 = scmp.eq.s32.totalorder %s34, 0
      %p161 = por %p159, %p160
      %p162 = scmp.ne.s32.totalorder %s148, %s149
      %p163 = scmp.eq.s32.totalorder %s35, 3
      %p164 = por %p162, %p163
      %p166 = scmp.ne.s32.totalorder %s149, %s165
      %p167 = scmp.eq.s32.totalorder %s35, 0
      %p168 = por %p166, %p167
      %s169 = ssub.s32 %s37, %s44
      %p170 = scmp.eq.s32.totalorder %s169, 0
      %s172 = sadd.s32 %s171, 1
      %s173 = scalar_select %p170, %s171, %s172
      %p176 = pneg %p170
      %p177 = scmp.eq.s32.totalorder %s29, 3
      %p178 = por %p176, %p177
      %p179 = scmp.ne.s32.totalorder %s171, %s174
      %p180 = scmp.eq.s32.totalorder %s29, 0
      %p181 = por %p179, %p180
      %p182 = scmp.ne.s32.totalorder %s171, %s174
      %p183 = scmp.eq.s32.totalorder %s34, 3
      %p184 = por %p182, %p183
      %p185 = scmp.ne.s32.totalorder %s174, %s175
      %p186 = scmp.eq.s32.totalorder %s34, 0
      %p187 = por %p185, %p186
      %p188 = scmp.ne.s32.totalorder %s174, %s175
      %p189 = scmp.eq.s32.totalorder %s35, 3
      %p190 = por %p188, %p189
      %p192 = scmp.ne.s32.totalorder %s175, %s191
      %p193 = scmp.eq.s32.totalorder %s35, 0
      %p194 = por %p192, %p193
      %s195 = ssub.s32 %s37, %s44
      %p196 = scmp.eq.s32.totalorder %s195, 0
      %s198 = sadd.s32 %s197, 1
      %s199 = scalar_select %p196, %s197, %s198
      %p202 = pneg %p196
      %p203 = scmp.eq.s32.totalorder %s29, 3
      %p204 = por %p202, %p203
      %p205 = scmp.ne.s32.totalorder %s197, %s200
      %p206 = scmp.eq.s32.totalorder %s29, 0
      %p207 = por %p205, %p206
      %p208 = scmp.ne.s32.totalorder %s197, %s200
      %p209 = scmp.eq.s32.totalorder %s34, 3
      %p210 = por %p208, %p209
      %p211 = scmp.ne.s32.totalorder %s200, %s201
      %p212 = scmp.eq.s32.totalorder %s34, 0
      %p213 = por %p211, %p212
      %p214 = scmp.ne.s32.totalorder %s200, %s201
      %p215 = scmp.eq.s32.totalorder %s35, 3
      %p216 = por %p214, %p215
      %p218 = scmp.ne.s32.totalorder %s201, %s217
      %p219 = scmp.eq.s32.totalorder %s35, 0
      %p220 = por %p218, %p219
      %s221 = ssub.s32 %s37, %s44
      %p222 = scmp.eq.s32.totalorder %s221, 0
      %s224 = sadd.s32 %s223, 1
      %s225 = scalar_select %p222, %s223, %s224
      %p228 = pneg %p222
      %p229 = scmp.eq.s32.totalorder %s29, 3
      %p230 = por %p228, %p229
      %p231 = scmp.ne.s32.totalorder %s223, %s226
      %p232 = scmp.eq.s32.totalorder %s29, 0
      %p233 = por %p231, %p232
      %p234 = scmp.ne.s32.totalorder %s223, %s226
      %p235 = scmp.eq.s32.totalorder %s34, 3
      %p236 = por %p234, %p235
      %p237 = scmp.ne.s32.totalorder %s226, %s227
      %p238 = scmp.eq.s32.totalorder %s34, 0
      %p239 = por %p237, %p238
      %p240 = scmp.ne.s32.totalorder %s226, %s227
      %p241 = scmp.eq.s32.totalorder %s35, 3
      %p242 = por %p240, %p241
      %p244 = scmp.ne.s32.totalorder %s227, %s243
      %p245 = scmp.eq.s32.totalorder %s35, 0
      %p246 = por %p244, %p245
      %s247 = ssub.s32 %s37, %s44
      %p248 = scmp.eq.s32.totalorder %s247, 0
      %s250 = sadd.s32 %s249, 1
      %s251 = scalar_select %p248, %s249, %s250
      %p254 = pneg %p248
      %p255 = scmp.eq.s32.totalorder %s29, 3
      %p256 = por %p254, %p255
      %p257 = scmp.ne.s32.totalorder %s249, %s252
      %p258 = scmp.eq.s32.totalorder %s29, 0
      %p259 = por %p257, %p258
      %p260 = scmp.ne.s32.totalorder %s249, %s252
      %p261 = scmp.eq.s32.totalorder %s34, 3
      %p262 = por %p260, %p261
      %p263 = scmp.ne.s32.totalorder %s252, %s253
      %p264 = scmp.eq.s32.totalorder %s34, 0
      %p265 = por %p263, %p264
      %p266 = scmp.ne.s32.totalorder %s252, %s253
      %p267 = scmp.eq.s32.totalorder %s35, 3
      %p268 = por %p266, %p267
      %p270 = scmp.ne.s32.totalorder %s253, %s269
      %p271 = scmp.eq.s32.totalorder %s35, 0
      %p272 = por %p270, %p271
      %s273 = ssub.s32 %s37, %s44
      %p274 = scmp.eq.s32.totalorder %s273, 0
      %s276 = sadd.s32 %s275, 1
      %s277 = scalar_select %p274, %s275, %s276
      %p280 = pneg %p274
      %p281 = scmp.eq.s32.totalorder %s29, 3
      %p282 = por %p280, %p281
      %p283 = scmp.ne.s32.totalorder %s275, %s278
      %p284 = scmp.eq.s32.totalorder %s29, 0
      %p285 = por %p283, %p284
      %p286 = scmp.ne.s32.totalorder %s275, %s278
      %p287 = scmp.eq.s32.totalorder %s34, 3
      %p288 = por %p286, %p287
      %p289 = scmp.ne.s32.totalorder %s278, %s279
      %p290 = scmp.eq.s32.totalorder %s34, 0
      %p291 = por %p289, %p290
      %p292 = scmp.ne.s32.totalorder %s278, %s279
      %p293 = scmp.eq.s32.totalorder %s35, 3
      %p294 = por %p292, %p293
      %p296 = scmp.ne.s32.totalorder %s279, %s295
      %p297 = scmp.eq.s32.totalorder %s35, 0
      %p298 = por %p296, %p297
      %s299 = ssub.s32 %s37, %s44
      %p300 = scmp.eq.s32.totalorder %s299, 0
      %s302 = sadd.s32 %s301, 1
      %s303 = scalar_select %p300, %s301, %s302
      %p306 = pneg %p300
      %p307 = scmp.eq.s32.totalorder %s29, 3
      %p308 = por %p306, %p307
      %p309 = scmp.ne.s32.totalorder %s301, %s304
      %p310 = scmp.eq.s32.totalorder %s29, 0
      %p311 = por %p309, %p310
      %p312 = scmp.ne.s32.totalorder %s301, %s304
      %p313 = scmp.eq.s32.totalorder %s34, 3
      %p314 = por %p312, %p313
      %p315 = scmp.ne.s32.totalorder %s304, %s305
      %p316 = scmp.eq.s32.totalorder %s34, 0
      %p317 = por %p315, %p316
      %p318 = scmp.ne.s32.totalorder %s304, %s305
      %p319 = scmp.eq.s32.totalorder %s35, 3
      %p320 = por %p318, %p319
      %p322 = scmp.ne.s32.totalorder %s305, %s321
      %p323 = scmp.eq.s32.totalorder %s35, 0
      %p324 = por %p322, %p323
      %s325 = ssub.s32 %s37, %s44
      %p326 = scmp.eq.s32.totalorder %s325, 0
      %s328 = sadd.s32 %s327, 1
      %s329 = scalar_select %p326, %s327, %s328
      %p332 = pneg %p326
      %p333 = scmp.eq.s32.totalorder %s29, 3
      %p334 = por %p332, %p333
      %p335 = scmp.ne.s32.totalorder %s327, %s330
      %p336 = scmp.eq.s32.totalorder %s29, 0
      %p337 = por %p335, %p336
      %p338 = scmp.ne.s32.totalorder %s327, %s330
      %p339 = scmp.eq.s32.totalorder %s34, 3
      %p340 = por %p338, %p339
      %p341 = scmp.ne.s32.totalorder %s330, %s331
      %p342 = scmp.eq.s32.totalorder %s34, 0
      %p343 = por %p341, %p342
      %p344 = scmp.ne.s32.totalorder %s330, %s331
      %p345 = scmp.eq.s32.totalorder %s35, 3
      %p346 = por %p344, %p345
      %p348 = scmp.ne.s32.totalorder %s331, %s347
      %p349 = scmp.eq.s32.totalorder %s35, 0
      %p350 = por %p348, %p349
      %s351 = ssub.s32 %s37, %s44
      %p352 = scmp.eq.s32.totalorder %s351, 0
      %s354 = sadd.s32 %s353, 1
      %s355 = scalar_select %p352, %s353, %s354
      %p358 = pneg %p352
      %p359 = scmp.eq.s32.totalorder %s29, 3
      %p360 = por %p358, %p359
      %p361 = scmp.ne.s32.totalorder %s353, %s356
      %p362 = scmp.eq.s32.totalorder %s29, 0
      %p363 = por %p361, %p362
      %p364 = scmp.ne.s32.totalorder %s353, %s356
      %p365 = scmp.eq.s32.totalorder %s34, 3
      %p366 = por %p364, %p365
      %p367 = scmp.ne.s32.totalorder %s356, %s357
      %p368 = scmp.eq.s32.totalorder %s34, 0
      %p369 = por %p367, %p368
      %p370 = scmp.ne.s32.totalorder %s356, %s357
      %p371 = scmp.eq.s32.totalorder %s35, 3
      %p372 = por %p370, %p371
      %p374 = scmp.ne.s32.totalorder %s357, %s373
      %p375 = scmp.eq.s32.totalorder %s35, 0
      %p376 = por %p374, %p375
      %s377 = ssub.s32 %s37, %s44
      %p378 = scmp.eq.s32.totalorder %s377, 0
      %s380 = sadd.s32 %s379, 1
      %s381 = scalar_select %p378, %s379, %s380
      %p384 = pneg %p378
      %p385 = scmp.eq.s32.totalorder %s29, 3
      %p386 = por %p384, %p385
      %p387 = scmp.ne.s32.totalorder %s379, %s382
      %p388 = scmp.eq.s32.totalorder %s29, 0
      %p389 = por %p387, %p388
      %p390 = scmp.ne.s32.totalorder %s379, %s382
      %p391 = scmp.eq.s32.totalorder %s34, 3
      %p392 = por %p390, %p391
      %p393 = scmp.ne.s32.totalorder %s382, %s383
      %p394 = scmp.eq.s32.totalorder %s34, 0
      %p395 = por %p393, %p394
      %p396 = scmp.ne.s32.totalorder %s382, %s383
      %p397 = scmp.eq.s32.totalorder %s35, 3
      %p398 = por %p396, %p397
      %p400 = scmp.ne.s32.totalorder %s383, %s399
      %p401 = scmp.eq.s32.totalorder %s35, 0
      %p402 = por %p400, %p401
      %s403 = ssub.s32 %s37, %s44
      %p404 = scmp.eq.s32.totalorder %s403, 0
      %s406 = sadd.s32 %s405, 1
      %s407 = scalar_select %p404, %s405, %s406
      %p410 = pneg %p404
      %p411 = scmp.eq.s32.totalorder %s29, 3
      %p412 = por %p410, %p411
      %p413 = scmp.ne.s32.totalorder %s405, %s408
      %p414 = scmp.eq.s32.totalorder %s29, 0
      %p415 = por %p413, %p414
      %p416 = scmp.ne.s32.totalorder %s405, %s408
      %p417 = scmp.eq.s32.totalorder %s34, 3
      %p418 = por %p416, %p417
      %p419 = scmp.ne.s32.totalorder %s408, %s409
      %p420 = scmp.eq.s32.totalorder %s34, 0
      %p421 = por %p419, %p420
      %p422 = scmp.ne.s32.totalorder %s408, %s409
      %p423 = scmp.eq.s32.totalorder %s35, 3
      %p424 = por %p422, %p423
      %p426 = scmp.ne.s32.totalorder %s409, %s425
      %p427 = scmp.eq.s32.totalorder %s35, 0
      %p428 = por %p426, %p427
      %s429 = ssub.s32 %s37, %s44
      %p430 = scmp.eq.s32.totalorder %s429, 0
      %s432 = sadd.s32 %s431, 1
      %s433 = scalar_select %p430, %s431, %s432
      %p436 = pneg %p430
      %p437 = scmp.eq.s32.totalorder %s29, 3
      %p438 = por %p436, %p437
      %p439 = scmp.ne.s32.totalorder %s431, %s434
      %p440 = scmp.eq.s32.totalorder %s29, 0
      %p441 = por %p439, %p440
      %p442 = scmp.ne.s32.totalorder %s431, %s434
      %p443 = scmp.eq.s32.totalorder %s34, 3
      %p444 = por %p442, %p443
      %p445 = scmp.ne.s32.totalorder %s434, %s435
      %p446 = scmp.eq.s32.totalorder %s34, 0
      %p447 = por %p445, %p446
      %p448 = scmp.ne.s32.totalorder %s434, %s435
      %p449 = scmp.eq.s32.totalorder %s35, 3
      %p450 = por %p448, %p449
      %p452 = scmp.ne.s32.totalorder %s435, %s451
      %p453 = scmp.eq.s32.totalorder %s35, 0
      %p454 = por %p452, %p453
      %s455 = ssub.s32 %s36, %s48
      %p456 = scmp.eq.s32.totalorder %s455, 0
      %s458 = sadd.s32 %s457, 1
      %s459 = scalar_select %p456, %s457, %s458
      %p462 = pneg %p456
      %p463 = scmp.eq.s32.totalorder %s29, 3
      %p464 = por %p462, %p463
      %p465 = scmp.ne.s32.totalorder %s457, %s460
      %p466 = scmp.eq.s32.totalorder %s29, 0
      %p467 = por %p465, %p466
      %p468 = scmp.ne.s32.totalorder %s457, %s460
      %p469 = scmp.eq.s32.totalorder %s34, 3
      %p470 = por %p468, %p469
      %p471 = scmp.ne.s32.totalorder %s460, %s461
      %p472 = scmp.eq.s32.totalorder %s34, 0
      %p473 = por %p471, %p472
      %p474 = scmp.ne.s32.totalorder %s460, %s461
      %p475 = scmp.eq.s32.totalorder %s35, 3
      %p476 = por %p474, %p475
      %p478 = scmp.ne.s32.totalorder %s461, %s477
      %p479 = scmp.eq.s32.totalorder %s35, 0
      %p480 = por %p478, %p479
      %p481 = scmp.le.s32.totalorder 1, %s29
      %p482 = scmp.lt.s32.totalorder %s29, 5
      %p483 = pnand %p481, %p482
      %p484 = pneg %p483
      // Predicated region
      $region9: #{tpu_custom_call.1} parent=5 // pred_check
        _
      $region10: #{tpu_custom_call.1} parent=5 // pred_check_branch
        %486 = sbr.rel (%p483) target = $region12
      $region11: #{tpu_custom_call.1} parent=5 // pred_region
        %s487 = ssub.s32 %s29, 1
        // Predicated region
        $region13: #{tpu_custom_call.1} parent=11 // pred_check
          %p488 = pneg %p114
        $region14: #{tpu_custom_call.1} parent=11 // pred_check_branch
          %490 = sbr.rel (%p488) target = $region16
        $region15: #{tpu_custom_call.1} parent=11 // pred_region
          %492 = vsyncadd [#allocation7], 0
          %s494 = sshll.u32 %s2, 4
          %s495 = int_to_ptr.hbm [resolvable:$true] %s494
          %s496 = sshll.u32 [#allocation6], 4
          %s497 = int_to_ptr.vmem [resolvable:$true] %s496
          %499 = dma.hbm_to_vmem [thread:$0]  %s495, 32, %s497, [#allocation7]
        $region16: #{tpu_custom_call.1} parent=11 // pred_fallthru
          _
        // Predicated region
        $region17: #{tpu_custom_call.1} parent=11 // pred_check
          %p500 = pneg %p135
        $region18: #{tpu_custom_call.1} parent=11 // pred_check_branch
          %502 = sbr.rel (%p500) target = $region20
        $region19: #{tpu_custom_call.1} parent=11 // pred_region
          _
        $region20: #{tpu_custom_call.1} parent=11 // pred_fallthru
          _
      $region12: #{tpu_custom_call.1} parent=5 // pred_fallthru
        _
      %p503 = scmp.lt.s32.totalorder %s29, 4
      // Predicated region
      $region21: #{tpu_custom_call.1} parent=5 // pred_check
        %p504 = pneg %p503
      $region22: #{tpu_custom_call.1} parent=5 // pred_check_branch
        %506 = sbr.rel (%p504) target = $region24
      $region23: #{tpu_custom_call.1} parent=5 // pred_region
        // Predicated region
        $region25: #{tpu_custom_call.1} parent=23 // pred_check
          %p507 = pneg %p61
        $region26: #{tpu_custom_call.1} parent=23 // pred_check_branch
          %509 = sbr.rel (%p507) target = $region28
        $region27: #{tpu_custom_call.1} parent=23 // pred_region
          %p510 = scmp.lt.s32.totalorder %s36, 1
          %s511 = scalar_select %p510, %s36, 1
          %s512 = smul.addr %s511, 8
          %s513 = scalar_lea.vmem %s0, %s512
        $region28: #{tpu_custom_call.1} parent=23 // pred_fallthru
          _
        // Predicated region
        $region29: #{tpu_custom_call.1} parent=23 // pred_check
          %p514 = pneg %p87
        $region30: #{tpu_custom_call.1} parent=23 // pred_check_branch
          %516 = sbr.rel (%p514) target = $region32
        $region31: #{tpu_custom_call.1} parent=23 // pred_region
          %s517 = sand.u32 %s29, 1
          %s518 = scalar_lea.sflag [#allocation4], %s517
          %s519 = sand.u32 %s77, 1
          %s520 = scalar_lea.vmem [#allocation3], %s519
          %522 = vsyncadd %s518, 0
          %s523 = scalar_lea.hbm %s1, %s36
          %s525 = sshll.u32 %s523, 4
          %s526 = int_to_ptr.hbm [resolvable:$true] %s525
          %s527 = sshll.u32 %s520, 4
          %s528 = int_to_ptr.vmem [resolvable:$true] %s527
          %530 = dma.hbm_to_vmem [thread:$0]  %s526, 16, %s528, %s518
        $region32: #{tpu_custom_call.1} parent=23 // pred_fallthru
          _
        // Predicated region
        $region33: #{tpu_custom_call.1} parent=23 // pred_check
          %p531 = pneg %p155
        $region34: #{tpu_custom_call.1} parent=23 // pred_check_branch
          %533 = sbr.rel (%p531) target = $region36
        $region35: #{tpu_custom_call.1} parent=23 // pred_region
          %p534 = scmp.lt.s32.totalorder %s37, 1
          %s535 = scalar_select %p534, %s37, 1
          %s536 = smul.addr %s535, 4
          %s537 = smul.addr %s536, 4
          %s538 = scalar_lea.vmem %s4, %s537
        $region36: #{tpu_custom_call.1} parent=23 // pred_fallthru
          _
        // Predicated region
        $region37: #{tpu_custom_call.1} parent=23 // pred_check
          %p539 = pneg %p181
        $region38: #{tpu_custom_call.1} parent=23 // pred_check_branch
          %541 = sbr.rel (%p539) target = $region40
        $region39: #{tpu_custom_call.1} parent=23 // pred_region
          %s542 = sand.u32 %s29, 1
          %s543 = scalar_lea.sflag [#allocation4], %s542
          %s544 = sand.u32 %s171, 1
          %s545 = scalar_lea.vmem [#allocation8], %s544
          %547 = vsyncadd %s543, 0
          %s548 = scalar_lea.hbm %s5, %s37
          %s550 = sshll.u32 %s548, 4
          %s551 = int_to_ptr.hbm [resolvable:$true] %s550
          %s552 = sshll.u32 %s545, 4
          %s553 = int_to_ptr.vmem [resolvable:$true] %s552
          %555 = dma.hbm_to_vmem [thread:$0]  %s551, 16, %s553, %s543
        $region40: #{tpu_custom_call.1} parent=23 // pred_fallthru
          _
        // Predicated region
        $region41: #{tpu_custom_call.1} parent=23 // pred_check
          %p556 = pneg %p207
        $region42: #{tpu_custom_call.1} parent=23 // pred_check_branch
          %558 = sbr.rel (%p556) target = $region44
        $region43: #{tpu_custom_call.1} parent=23 // pred_region
          %p559 = scmp.lt.s32.totalorder %s37, 1
          %s560 = scalar_select %p559, %s37, 1
          %s561 = smul.addr %s560, 4
          %s562 = smul.addr %s561, 4
          %s563 = scalar_lea.vmem %s6, %s562
        $region44: #{tpu_custom_call.1} parent=23 // pred_fallthru
          _
        // Predicated region
        $region45: #{tpu_custom_call.1} parent=23 // pred_check
          %p564 = pneg %p233
        $region46: #{tpu_custom_call.1} parent=23 // pred_check_branch
          %566 = sbr.rel (%p564) target = $region48
        $region47: #{tpu_custom_call.1} parent=23 // pred_region
          %s567 = sand.u32 %s29, 1
          %s568 = scalar_lea.sflag [#allocation4], %s567
          %s569 = sand.u32 %s223, 1
          %s570 = scalar_lea.vmem [#allocation9], %s569
          %572 = vsyncadd %s568, 0
          %s573 = scalar_lea.hbm %s7, %s37
          %s575 = sshll.u32 %s573, 4
          %s576 = int_to_ptr.hbm [resolvable:$true] %s575
          %s577 = sshll.u32 %s570, 4
          %s578 = int_to_ptr.vmem [resolvable:$true] %s577
          %580 = dma.hbm_to_vmem [thread:$0]  %s576, 16, %s578, %s568
        $region48: #{tpu_custom_call.1} parent=23 // pred_fallthru
          _
        // Predicated region
        $region49: #{tpu_custom_call.1} parent=23 // pred_check
          %p581 = pneg %p259
        $region50: #{tpu_custom_call.1} parent=23 // pred_check_branch
          %583 = sbr.rel (%p581) target = $region52
        $region51: #{tpu_custom_call.1} parent=23 // pred_region
          %p584 = scmp.lt.s32.totalorder %s37, 1
          %s585 = scalar_select %p584, %s37, 1
          %s586 = smul.addr %s585, 4
          %s587 = smul.addr %s586, 4
          %s588 = scalar_lea.vmem %s8, %s587
        $region52: #{tpu_custom_call.1} parent=23 // pred_fallthru
          _
        // Predicated region
        $region53: #{tpu_custom_call.1} parent=23 // pred_check
          %p589 = pneg %p285
        $region54: #{tpu_custom_call.1} parent=23 // pred_check_branch
          %591 = sbr.rel (%p589) target = $region56
        $region55: #{tpu_custom_call.1} parent=23 // pred_region
          %s592 = sand.u32 %s29, 1
          %s593 = scalar_lea.sflag [#allocation4], %s592
          %s594 = sand.u32 %s275, 1
          %s595 = scalar_lea.vmem [#allocation10], %s594
          %597 = vsyncadd %s593, 0
          %s598 = scalar_lea.hbm %s9, %s37
          %s600 = sshll.u32 %s598, 4
          %s601 = int_to_ptr.hbm [resolvable:$true] %s600
          %s602 = sshll.u32 %s595, 4
          %s603 = int_to_ptr.vmem [resolvable:$true] %s602
          %605 = dma.hbm_to_vmem [thread:$0]  %s601, 16, %s603, %s593
        $region56: #{tpu_custom_call.1} parent=23 // pred_fallthru
          _
        // Predicated region
        $region57: #{tpu_custom_call.1} parent=23 // pred_check
          %p606 = pneg %p311
        $region58: #{tpu_custom_call.1} parent=23 // pred_check_branch
          %608 = sbr.rel (%p606) target = $region60
        $region59: #{tpu_custom_call.1} parent=23 // pred_region
          %p609 = scmp.lt.s32.totalorder %s37, 1
          %s610 = scalar_select %p609, %s37, 1
          %s611 = smul.addr %s610, 8
          %s612 = smul.addr %s611, 4
          %s613 = scalar_lea.vmem %s10, %s612
        $region60: #{tpu_custom_call.1} parent=23 // pred_fallthru
          _
        // Predicated region
        $region61: #{tpu_custom_call.1} parent=23 // pred_check
          %p614 = pneg %p337
        $region62: #{tpu_custom_call.1} parent=23 // pred_check_branch
          %616 = sbr.rel (%p614) target = $region64
        $region63: #{tpu_custom_call.1} parent=23 // pred_region
          %s617 = sand.u32 %s29, 1
          %s618 = scalar_lea.sflag [#allocation4], %s617
          %s619 = sand.u32 %s327, 1
          %s620 = scalar_lea.vmem [#allocation11], %s619
          %622 = vsyncadd %s618, 0
          %s623 = scalar_lea.hbm %s11, %s37
          %s625 = sshll.u32 %s623, 4
          %s626 = int_to_ptr.hbm [resolvable:$true] %s625
          %s627 = sshll.u32 %s620, 4
          %s628 = int_to_ptr.vmem [resolvable:$true] %s627
          %630 = dma.hbm_to_vmem [thread:$0]  %s626, 16, %s628, %s618
        $region64: #{tpu_custom_call.1} parent=23 // pred_fallthru
          _
        // Predicated region
        $region65: #{tpu_custom_call.1} parent=23 // pred_check
          %p631 = pneg %p363
        $region66: #{tpu_custom_call.1} parent=23 // pred_check_branch
          %633 = sbr.rel (%p631) target = $region68
        $region67: #{tpu_custom_call.1} parent=23 // pred_region
          %p634 = scmp.lt.s32.totalorder %s37, 1
          %s635 = scalar_select %p634, %s37, 1
          %s636 = scalar_lea.vmem %s12, %s635
        $region68: #{tpu_custom_call.1} parent=23 // pred_fallthru
          _
        // Predicated region
        $region69: #{tpu_custom_call.1} parent=23 // pred_check
          %p637 = pneg %p389
        $region70: #{tpu_custom_call.1} parent=23 // pred_check_branch
          %639 = sbr.rel (%p637) target = $region72
        $region71: #{tpu_custom_call.1} parent=23 // pred_region
          %s640 = sand.u32 %s29, 1
          %s641 = scalar_lea.sflag [#allocation4], %s640
          %s642 = sand.u32 %s379, 1
          %s643 = scalar_lea.vmem [#allocation12], %s642
          %645 = vsyncadd %s641, 0
          %s646 = scalar_lea.hbm %s13, %s37
          %s648 = sshll.u32 %s646, 4
          %s649 = int_to_ptr.hbm [resolvable:$true] %s648
          %s650 = sshll.u32 %s643, 4
          %s651 = int_to_ptr.vmem [resolvable:$true] %s650
          %653 = dma.hbm_to_vmem [thread:$0]  %s649, 16, %s651, %s641
        $region72: #{tpu_custom_call.1} parent=23 // pred_fallthru
          _
        // Predicated region
        $region73: #{tpu_custom_call.1} parent=23 // pred_check
          %p654 = pneg %p415
        $region74: #{tpu_custom_call.1} parent=23 // pred_check_branch
          %656 = sbr.rel (%p654) target = $region76
        $region75: #{tpu_custom_call.1} parent=23 // pred_region
          %p657 = scmp.lt.s32.totalorder %s37, 1
          %s658 = scalar_select %p657, %s37, 1
          %s659 = scalar_lea.vmem %s14, %s658
        $region76: #{tpu_custom_call.1} parent=23 // pred_fallthru
          _
        // Predicated region
        $region77: #{tpu_custom_call.1} parent=23 // pred_check
          %p660 = pneg %p441
        $region78: #{tpu_custom_call.1} parent=23 // pred_check_branch
          %662 = sbr.rel (%p660) target = $region80
        $region79: #{tpu_custom_call.1} parent=23 // pred_region
          %s663 = sand.u32 %s29, 1
          %s664 = scalar_lea.sflag [#allocation4], %s663
          %s665 = sand.u32 %s431, 1
          %s666 = scalar_lea.vmem [#allocation13], %s665
          %668 = vsyncadd %s664, 0
          %s669 = scalar_lea.hbm %s15, %s37
          %s671 = sshll.u32 %s669, 4
          %s672 = int_to_ptr.hbm [resolvable:$true] %s671
          %s673 = sshll.u32 %s666, 4
          %s674 = int_to_ptr.vmem [resolvable:$true] %s673
          %676 = dma.hbm_to_vmem [thread:$0]  %s672, 16, %s674, %s664
        $region80: #{tpu_custom_call.1} parent=23 // pred_fallthru
          _
      $region24: #{tpu_custom_call.1} parent=5 // pred_fallthru
        _
      %p677 = scmp.le.s32.totalorder 1, %s29
      %p678 = scmp.lt.s32.totalorder %s29, 5
      %p679 = pnand %p677, %p678
      %p680 = pneg %p679
      // Predicated region
      $region81: #{tpu_custom_call.1} parent=5 // pred_check
        _
      $region82: #{tpu_custom_call.1} parent=5 // pred_check_branch
        %682 = sbr.rel (%p679) target = $region84
      $region83: #{tpu_custom_call.1} parent=5 // pred_region
        %s683 = ssub.s32 %s29, 1
        %s684 = sand.u32 %s34, 1
        %s685 = scalar_lea.sflag [#allocation4], %s684
        %s686 = sand.u32 %s80, 1
        %s687 = scalar_lea.vmem [#allocation3], %s686
        // Predicated region
        $region85: #{tpu_custom_call.1} parent=83 // pred_check
          %p688 = pneg %p93
        $region86: #{tpu_custom_call.1} parent=83 // pred_check_branch
          %690 = sbr.rel (%p688) target = $region88
        $region87: #{tpu_custom_call.1} parent=83 // pred_region
          %692 = dma.done %s685, 16
        $region88: #{tpu_custom_call.1} parent=83 // pred_fallthru
          _
        // Predicated region
        $region89: #{tpu_custom_call.1} parent=83 // pred_check
          %p693 = pneg %p114
        $region90: #{tpu_custom_call.1} parent=83 // pred_check_branch
          %695 = sbr.rel (%p693) target = $region92
        $region91: #{tpu_custom_call.1} parent=83 // pred_region
          %697 = dma.done [#allocation7], 32
        $region92: #{tpu_custom_call.1} parent=83 // pred_fallthru
          _
        %s698 = sand.u32 %s34, 1
        %s699 = scalar_lea.sflag [#allocation4], %s698
        %s700 = sand.u32 %s174, 1
        %s701 = scalar_lea.vmem [#allocation8], %s700
        // Predicated region
        $region93: #{tpu_custom_call.1} parent=83 // pred_check
          %p702 = pneg %p187
        $region94: #{tpu_custom_call.1} parent=83 // pred_check_branch
          %704 = sbr.rel (%p702) target = $region96
        $region95: #{tpu_custom_call.1} parent=83 // pred_region
          %706 = dma.done %s699, 16
        $region96: #{tpu_custom_call.1} parent=83 // pred_fallthru
          _
        %s707 = sand.u32 %s34, 1
        %s708 = scalar_lea.sflag [#allocation4], %s707
        %s709 = sand.u32 %s226, 1
        %s710 = scalar_lea.vmem [#allocation9], %s709
        // Predicated region
        $region97: #{tpu_custom_call.1} parent=83 // pred_check
          %p711 = pneg %p239
        $region98: #{tpu_custom_call.1} parent=83 // pred_check_branch
          %713 = sbr.rel (%p711) target = $region100
        $region99: #{tpu_custom_call.1} parent=83 // pred_region
          %715 = dma.done %s708, 16
        $region100: #{tpu_custom_call.1} parent=83 // pred_fallthru
          _
        %s716 = sand.u32 %s34, 1
        %s717 = scalar_lea.sflag [#allocation4], %s716
        %s718 = sand.u32 %s278, 1
        %s719 = scalar_lea.vmem [#allocation10], %s718
        // Predicated region
        $region101: #{tpu_custom_call.1} parent=83 // pred_check
          %p720 = pneg %p291
        $region102: #{tpu_custom_call.1} parent=83 // pred_check_branch
          %722 = sbr.rel (%p720) target = $region104
        $region103: #{tpu_custom_call.1} parent=83 // pred_region
          %724 = dma.done %s717, 16
        $region104: #{tpu_custom_call.1} parent=83 // pred_fallthru
          _
        %s725 = sand.u32 %s34, 1
        %s726 = scalar_lea.sflag [#allocation4], %s725
        %s727 = sand.u32 %s330, 1
        %s728 = scalar_lea.vmem [#allocation11], %s727
        // Predicated region
        $region105: #{tpu_custom_call.1} parent=83 // pred_check
          %p729 = pneg %p343
        $region106: #{tpu_custom_call.1} parent=83 // pred_check_branch
          %731 = sbr.rel (%p729) target = $region108
        $region107: #{tpu_custom_call.1} parent=83 // pred_region
          %733 = dma.done %s726, 16
        $region108: #{tpu_custom_call.1} parent=83 // pred_fallthru
          _
        %s734 = sand.u32 %s34, 1
        %s735 = scalar_lea.sflag [#allocation4], %s734
        %s736 = sand.u32 %s382, 1
        %s737 = scalar_lea.vmem [#allocation12], %s736
        // Predicated region
        $region109: #{tpu_custom_call.1} parent=83 // pred_check
          %p738 = pneg %p395
        $region110: #{tpu_custom_call.1} parent=83 // pred_check_branch
          %740 = sbr.rel (%p738) target = $region112
        $region111: #{tpu_custom_call.1} parent=83 // pred_region
          %742 = dma.done %s735, 16
        $region112: #{tpu_custom_call.1} parent=83 // pred_fallthru
          _
        %s743 = sand.u32 %s34, 1
        %s744 = scalar_lea.sflag [#allocation4], %s743
        %s745 = sand.u32 %s434, 1
        %s746 = scalar_lea.vmem [#allocation13], %s745
        // Predicated region
        $region113: #{tpu_custom_call.1} parent=83 // pred_check
          %p747 = pneg %p447
        $region114: #{tpu_custom_call.1} parent=83 // pred_check_branch
          %749 = sbr.rel (%p747) target = $region116
        $region115: #{tpu_custom_call.1} parent=83 // pred_region
          %751 = dma.done %s744, 16
        $region116: #{tpu_custom_call.1} parent=83 // pred_fallthru
          _
        %p752 = scmp.lt.s32.totalorder %s38, 1
        %s753 = scalar_select %p752, %s38, 1
        %s754 = smul.addr %s753, 8
        %s755 = scalar_lea.vmem %s0, %s754
        %p756 = pneg %p67
        %p757 = pneg %p64
        %s758 = sand.u32 %s34, 1
        %s759 = scalar_lea.sflag [#allocation4], %s758
        %s760 = sand.u32 %s80, 1
        %s761 = scalar_lea.vmem [#allocation3], %s760
        %p762 = pneg %p93
        %p763 = pneg %p90
        %p764 = pneg %p114
        %p765 = pneg %p111
        %p766 = pneg %p135
        %p767 = pneg %p132
        %p768 = scmp.lt.s32.totalorder %s39, 1
        %s769 = scalar_select %p768, %s39, 1
        %s770 = smul.addr %s769, 4
        %s771 = smul.addr %s770, 4
        %s772 = scalar_lea.vmem %s4, %s771
        %p773 = pneg %p161
        %p774 = pneg %p158
        %s775 = sand.u32 %s34, 1
        %s776 = scalar_lea.sflag [#allocation4], %s775
        %s777 = sand.u32 %s174, 1
        %s778 = scalar_lea.vmem [#allocation8], %s777
        %p779 = pneg %p187
        %p780 = pneg %p184
        %p781 = scmp.lt.s32.totalorder %s39, 1
        %s782 = scalar_select %p781, %s39, 1
        %s783 = smul.addr %s782, 4
        %s784 = smul.addr %s783, 4
        %s785 = scalar_lea.vmem %s6, %s784
        %p786 = pneg %p213
        %p787 = pneg %p210
        %s788 = sand.u32 %s34, 1
        %s789 = scalar_lea.sflag [#allocation4], %s788
        %s790 = sand.u32 %s226, 1
        %s791 = scalar_lea.vmem [#allocation9], %s790
        %p792 = pneg %p239
        %p793 = pneg %p236
        %p794 = scmp.lt.s32.totalorder %s39, 1
        %s795 = scalar_select %p794, %s39, 1
        %s796 = smul.addr %s795, 4
        %s797 = smul.addr %s796, 4
        %s798 = scalar_lea.vmem %s8, %s797
        %p799 = pneg %p265
        %p800 = pneg %p262
        %s801 = sand.u32 %s34, 1
        %s802 = scalar_lea.sflag [#allocation4], %s801
        %s803 = sand.u32 %s278, 1
        %s804 = scalar_lea.vmem [#allocation10], %s803
        %p805 = pneg %p291
        %p806 = pneg %p288
        %p807 = scmp.lt.s32.totalorder %s39, 1
        %s808 = scalar_select %p807, %s39, 1
        %s809 = smul.addr %s808, 8
        %s810 = smul.addr %s809, 4
        %s811 = scalar_lea.vmem %s10, %s810
        %p812 = pneg %p317
        %p813 = pneg %p314
        %s814 = sand.u32 %s34, 1
        %s815 = scalar_lea.sflag [#allocation4], %s814
        %s816 = sand.u32 %s330, 1
        %s817 = scalar_lea.vmem [#allocation11], %s816
        %p818 = pneg %p343
        %p819 = pneg %p340
        %p820 = scmp.lt.s32.totalorder %s39, 1
        %s821 = scalar_select %p820, %s39, 1
        %s822 = scalar_lea.vmem %s12, %s821
        %p823 = pneg %p369
        %p824 = pneg %p366
        %s825 = sand.u32 %s34, 1
        %s826 = scalar_lea.sflag [#allocation4], %s825
        %s827 = sand.u32 %s382, 1
        %s828 = scalar_lea.vmem [#allocation12], %s827
        %p829 = pneg %p395
        %p830 = pneg %p392
        %p831 = scmp.lt.s32.totalorder %s39, 1
        %s832 = scalar_select %p831, %s39, 1
        %s833 = scalar_lea.vmem %s14, %s832
        %p834 = pneg %p421
        %p835 = pneg %p418
        %s836 = sand.u32 %s34, 1
        %s837 = scalar_lea.sflag [#allocation4], %s836
        %s838 = sand.u32 %s434, 1
        %s839 = scalar_lea.vmem [#allocation13], %s838
        %p840 = pneg %p447
        %p841 = pneg %p444
        %p842 = pneg %p473
        %p843 = pneg %p470
        %s844 = sand.u32 %s460, 1
        %s845 = scalar_lea.sflag [#allocation5], %s844
        %s846 = sand.u32 %s460, 1
        %s847 = scalar_lea.vmem [#allocation14], %s846
        %p848 = scmp.lt.s32.totalorder %s38, 1
        %s849 = scalar_select %p848, %s38, 1
        %s850 = smul.addr %s849, 8
        %s851 = scalar_lea.vmem %s0, %s850
        %p852 = scmp.lt.s32.totalorder %s39, 1
        %s853 = scalar_select %p852, %s39, 1
        %s854 = smul.addr %s853, 4
        %s855 = smul.addr %s854, 4
        %s856 = scalar_lea.vmem %s4, %s855
        %p857 = scmp.lt.s32.totalorder %s39, 1
        %s858 = scalar_select %p857, %s39, 1
        %s859 = smul.addr %s858, 4
        %s860 = smul.addr %s859, 4
        %s861 = scalar_lea.vmem %s6, %s860
        %p862 = scmp.lt.s32.totalorder %s39, 1
        %s863 = scalar_select %p862, %s39, 1
        %s864 = smul.addr %s863, 4
        %s865 = smul.addr %s864, 4
        %s866 = scalar_lea.vmem %s8, %s865
        %p867 = scmp.lt.s32.totalorder %s39, 1
        %s868 = scalar_select %p867, %s39, 1
        %s869 = smul.addr %s868, 8
        %s870 = smul.addr %s869, 4
        %s871 = scalar_lea.vmem %s10, %s870
        %p872 = scmp.lt.s32.totalorder %s39, 1
        %s873 = scalar_select %p872, %s39, 1
        %s874 = scalar_lea.vmem %s12, %s873
        %p875 = scmp.lt.s32.totalorder %s39, 1
        %s876 = scalar_select %p875, %s39, 1
        %s877 = scalar_lea.vmem %s14, %s876
        %p879 = scmp.eq.s32.totalorder %s39, 0
        // Predicated region
        $region117: #{tpu_custom_call.1} parent=83 // pred_check
          %p880 = pneg %p879
        $region118: #{tpu_custom_call.1} parent=83 // pred_check_branch
          %882 = sbr.rel (%p880) target = $region120
        $region119: #{tpu_custom_call.1} parent=83 // pred_region
          %v883 = vld [vmem:[%s851] sm:$0xff]
          %v884 = vpack.c.bf16 %v883, %v883
          %v885 = vld [vmem:[#allocation6] sm:$0x3]
          %v886 = vld [vmem:[%s3] sm:$0x1]
          %v888 = vperm.slane %v886, 0
          %vm890 = vcmask 31744
          %v892 = vsel %vm890, %v884, 0
          %vm894 = vcmask 1041408
          %v896 = vsel %vm894, %v885, 0
          %898 = vmatpush.bf16.msra.mxu0 0
          %899 = vmatpush.bf16.msra.mxu0 0
          %900 = vmatpush.bf16.msra.mxu0 0
          %901 = vmatpush.bf16.msra.mxu0 0
          %902 = vmatpush.bf16.msra.mxu0 0
          %903 = vmatpush.bf16.msra.mxu0 0
          %904 = vmatpush.bf16.msra.mxu0 0
          %905 = vmatpush.bf16.msra.mxu0 %v896
          %906 = vmatmul.bf16.gmra.mxu0 %v892
          %v907 = vpop.f32.mrf.mxu0
          %v908 = vadd.f32 %v888, %v907
          %v909 = vpop.f32.mrf.mxu0
          %910 = vdwg.mxu0
          %v911 = vld [vmem:[%s687] sm:$0x1]
          %v913 = vperm.slane %v911, 0
          %v915 = vadd.f32 %v908, %v913
          %vm916 = vcmask 261120
          %917 = vst.msk [vmem:[#allocation2] sm:$0xff] %vm916, %v915
        $region120: #{tpu_custom_call.1} parent=83 // pred_fallthru
          _
        %v918 = vld [vmem:[#allocation2] sm:$0xff]
        %v919 = vpack.c.bf16 %v918, %v918
        %v920 = vld [vmem:[%s856] sm:$0xf]
        %v921 = vld [vmem:[%s856 + $0x4] sm:$0xf]
        %v922 = vld [vmem:[%s856 + $0x8] sm:$0xf]
        %v923 = vld [vmem:[%s856 + $0xc] sm:$0xf]
        %v924 = vld [vmem:[%s701] sm:$0x1]
        %v926 = vperm.slane %v924, 0
        %v932 = vunpack.c.l.b16 %v920
        %v933 = vunpack.c.l.b16 %v921
        %v934 = vunpack.c.l.b16 %v922
        %v935 = vunpack.c.l.b16 %v923
        %v936 = vpack.c.b16 %v933, %v932
        %v937 = vpack.c.b16 %v935, %v934
        %vm940 = vcmask 261120
        %v942 = vsel %vm940, %v919, 0
        %944 = vmatpush.bf16.msra.mxu0 0
        %945 = vmatpush.bf16.msra.mxu0 0
        %946 = vmatpush.bf16.msra.mxu0 0
        %947 = vmatpush.bf16.msra.mxu0 0
        %948 = vmatpush.bf16.msra.mxu0 0
        %949 = vmatpush.bf16.msra.mxu0 0
        %950 = vmatpush.bf16.msra.mxu0 %v937
        %951 = vmatpush.bf16.msra.mxu0 %v936
        %952 = vmatmul.bf16.gmra.mxu0 %v942
        %v953 = vpop.f32.mrf.mxu0
        %v954 = vadd.f32 %v926, %v953
        %v955 = vpop.f32.mrf.mxu0
        %956 = vdwg.mxu0
        %v957 = vpack.c.bf16 %v954, %v954
        %v959 = vunpack.c.l.b16 %v957
        %v960 = vpack.c.b16 %v959, %v959
        %961 = vrot.lane.b32.xlu0 %v960, 96
        %v962 = vpop.permute.xlu0 %961
        %vm963 = vcmask 64512
        %v965 = vsel %vm963, %v957, 0
        %v968 = vsel %vm963, %v962, 0
        %970 = vmatpush.bf16.xpose.msra.mxu0 0
        %971 = vmatpush.bf16.xpose.msra.mxu0 0
        %972 = vmatpush.bf16.xpose.msra.mxu0 0
        %973 = vmatpush.bf16.xpose.msra.mxu0 0
        %974 = vmatpush.bf16.xpose.msra.mxu0 0
        %975 = vmatpush.bf16.xpose.msra.mxu0 0
        %976 = vmatpush.bf16.xpose.msra.mxu0 0
        %977 = vmatpush.bf16.xpose.msra.mxu0 %v968
        %978 = vmatmul.bf16.gmra.mxu0 %v965
        %v979 = vpop.f32.mrf.mxu0
        %v980 = vadd.f32 0.0, %v979
        %v981 = vpop.f32.mrf.mxu0
        %982 = vdwg.mxu0
        %v983 = vsel %vm963, %v980, -inf
        %984 = vmax.xlane.f32.xlu0 %v983
        %v985 = vpop.xlane.xlu0 %984
        %v986 = vsub.f32 %v980, %v985
        %v987 = vmul.f32 %v986, 1.442695
        %v988 = vpow.pop %v987
        %v989 = vsel %vm963, %v988, 0.0
        %990 = vadd.xlane.f32.xlu0 %v989
        %v991 = vpop.xlane.xlu0 %990
        %v992 = vrcp.pop %v991
        %v993 = vmul.f32 %v988, %v992
        %v994 = vpack.c.bf16 %v993, %v993
        %995 = vrot.lane.b32.xlu0 %v960, 64
        %v996 = vpop.permute.xlu0 %995
        %v998 = vsel %vm963, %v994, 0
        %vm1000 = vcmask 1043456
        %v1002 = vsel %vm1000, %v996, 0
        %1004 = vmatpush.bf16.msra.mxu0 0
        %1005 = vmatpush.bf16.msra.mxu0 0
        %1006 = vmatpush.bf16.msra.mxu0 0
        %1007 = vmatpush.bf16.msra.mxu0 0
        %1008 = vmatpush.bf16.msra.mxu0 0
        %1009 = vmatpush.bf16.msra.mxu0 0
        %1010 = vmatpush.bf16.msra.mxu0 0
        %1011 = vmatpush.bf16.msra.mxu0 %v1002
        %1012 = vmatmul.bf16.gmra.mxu0 %v998
        %v1013 = vpop.f32.mrf.mxu0
        %v1014 = vadd.f32 0.0, %v1013
        %v1015 = vpop.f32.mrf.mxu0
        %1016 = vdwg.mxu0
        %1017 = vrot.lane.b32.xlu0 %v960, 120
        %v1018 = vpop.permute.xlu0 %1017
        %1019 = vrot.lane.b32.xlu0 %v960, 88
        %v1020 = vpop.permute.xlu0 %1019
        %v1022 = vsel %vm963, %v1018, 0
        %v1025 = vsel %vm963, %v1020, 0
        %1027 = vmatpush.bf16.xpose.msra.mxu0 0
        %1028 = vmatpush.bf16.xpose.msra.mxu0 0
        %1029 = vmatpush.bf16.xpose.msra.mxu0 0
        %1030 = vmatpush.bf16.xpose.msra.mxu0 0
        %1031 = vmatpush.bf16.xpose.msra.mxu0 0
        %1032 = vmatpush.bf16.xpose.msra.mxu0 0
        %1033 = vmatpush.bf16.xpose.msra.mxu0 0
        %1034 = vmatpush.bf16.xpose.msra.mxu0 %v1025
        %1035 = vmatmul.bf16.gmra.mxu0 %v1022
        %v1036 = vpop.f32.mrf.mxu0
        %v1037 = vadd.f32 0.0, %v1036
        %v1038 = vpop.f32.mrf.mxu0
        %1039 = vdwg.mxu0
        %v1040 = vsel %vm963, %v1037, -inf
        %1041 = vmax.xlane.f32.xlu0 %v1040
        %v1042 = vpop.xlane.xlu0 %1041
        %v1043 = vsub.f32 %v1037, %v1042
        %v1044 = vmul.f32 %v1043, 1.442695
        %v1045 = vpow.pop %v1044
        %v1046 = vsel %vm963, %v1045, 0.0
        %1047 = vadd.xlane.f32.xlu0 %v1046
        %v1048 = vpop.xlane.xlu0 %1047
        %v1049 = vrcp.pop %v1048
        %v1050 = vmul.f32 %v1045, %v1049
        %v1051 = vpack.c.bf16 %v1050, %v1050
        %1052 = vrot.lane.b32.xlu0 %v960, 56
        %v1053 = vpop.permute.xlu0 %1052
        %v1055 = vsel %vm963, %v1051, 0
        %v1058 = vsel %vm1000, %v1053, 0
        %1060 = vmatpush.bf16.msra.mxu0 0
        %1061 = vmatpush.bf16.msra.mxu0 0
        %1062 = vmatpush.bf16.msra.mxu0 0
        %1063 = vmatpush.bf16.msra.mxu0 0
        %1064 = vmatpush.bf16.msra.mxu0 0
        %1065 = vmatpush.bf16.msra.mxu0 0
        %1066 = vmatpush.bf16.msra.mxu0 0
        %1067 = vmatpush.bf16.msra.mxu0 %v1058
        %1068 = vmatmul.bf16.gmra.mxu0 %v1055
        %v1069 = vpop.f32.mrf.mxu0
        %v1070 = vadd.f32 0.0, %v1069
        %v1071 = vpop.f32.mrf.mxu0
        %1072 = vdwg.mxu0
        %1073 = vrot.lane.b32.xlu0 %v960, 112
        %v1074 = vpop.permute.xlu0 %1073
        %1075 = vrot.lane.b32.xlu0 %v960, 80
        %v1076 = vpop.permute.xlu0 %1075
        %v1078 = vsel %vm963, %v1074, 0
        %v1081 = vsel %vm963, %v1076, 0
        %1083 = vmatpush.bf16.xpose.msra.mxu0 0
        %1084 = vmatpush.bf16.xpose.msra.mxu0 0
        %1085 = vmatpush.bf16.xpose.msra.mxu0 0
        %1086 = vmatpush.bf16.xpose.msra.mxu0 0
        %1087 = vmatpush.bf16.xpose.msra.mxu0 0
        %1088 = vmatpush.bf16.xpose.msra.mxu0 0
        %1089 = vmatpush.bf16.xpose.msra.mxu0 0
        %1090 = vmatpush.bf16.xpose.msra.mxu0 %v1081
        %1091 = vmatmul.bf16.gmra.mxu0 %v1078
        %v1092 = vpop.f32.mrf.mxu0
        %v1093 = vadd.f32 0.0, %v1092
        %v1094 = vpop.f32.mrf.mxu0
        %1095 = vdwg.mxu0
        %v1096 = vsel %vm963, %v1093, -inf
        %1097 = vmax.xlane.f32.xlu0 %v1096
        %v1098 = vpop.xlane.xlu0 %1097
        %v1099 = vsub.f32 %v1093, %v1098
        %v1100 = vmul.f32 %v1099, 1.442695
        %v1101 = vpow.pop %v1100
        %v1102 = vsel %vm963, %v1101, 0.0
        %1103 = vadd.xlane.f32.xlu0 %v1102
        %v1104 = vpop.xlane.xlu0 %1103
        %v1105 = vrcp.pop %v1104
        %v1106 = vmul.f32 %v1101, %v1105
        %v1107 = vpack.c.bf16 %v1106, %v1106
        %1108 = vrot.lane.b32.xlu0 %v960, 48
        %v1109 = vpop.permute.xlu0 %1108
        %v1111 = vsel %vm963, %v1107, 0
        %v1114 = vsel %vm1000, %v1109, 0
        %1116 = vmatpush.bf16.msra.mxu0 0
        %1117 = vmatpush.bf16.msra.mxu0 0
        %1118 = vmatpush.bf16.msra.mxu0 0
        %1119 = vmatpush.bf16.msra.mxu0 0
        %1120 = vmatpush.bf16.msra.mxu0 0
        %1121 = vmatpush.bf16.msra.mxu0 0
        %1122 = vmatpush.bf16.msra.mxu0 0
        %1123 = vmatpush.bf16.msra.mxu0 %v1114
        %1124 = vmatmul.bf16.gmra.mxu0 %v1111
        %v1125 = vpop.f32.mrf.mxu0
        %v1126 = vadd.f32 0.0, %v1125
        %v1127 = vpop.f32.mrf.mxu0
        %1128 = vdwg.mxu0
        %1129 = vrot.lane.b32.xlu0 %v960, 104
        %v1130 = vpop.permute.xlu0 %1129
        %1131 = vrot.lane.b32.xlu0 %v960, 72
        %v1132 = vpop.permute.xlu0 %1131
        %v1134 = vsel %vm963, %v1130, 0
        %v1137 = vsel %vm963, %v1132, 0
        %1139 = vmatpush.bf16.xpose.msra.mxu0 0
        %1140 = vmatpush.bf16.xpose.msra.mxu0 0
        %1141 = vmatpush.bf16.xpose.msra.mxu0 0
        %1142 = vmatpush.bf16.xpose.msra.mxu0 0
        %1143 = vmatpush.bf16.xpose.msra.mxu0 0
        %1144 = vmatpush.bf16.xpose.msra.mxu0 0
        %1145 = vmatpush.bf16.xpose.msra.mxu0 0
        %1146 = vmatpush.bf16.xpose.msra.mxu0 %v1137
        %1147 = vmatmul.bf16.gmra.mxu0 %v1134
        %v1148 = vpop.f32.mrf.mxu0
        %v1149 = vadd.f32 0.0, %v1148
        %v1150 = vpop.f32.mrf.mxu0
        %1151 = vdwg.mxu0
        %v1152 = vsel %vm963, %v1149, -inf
        %1153 = vmax.xlane.f32.xlu0 %v1152
        %v1154 = vpop.xlane.xlu0 %1153
        %v1155 = vsub.f32 %v1149, %v1154
        %v1156 = vmul.f32 %v1155, 1.442695
        %v1157 = vpow.pop %v1156
        %v1158 = vsel %vm963, %v1157, 0.0
        %1159 = vadd.xlane.f32.xlu0 %v1158
        %v1160 = vpop.xlane.xlu0 %1159
        %v1161 = vrcp.pop %v1160
        %v1162 = vmul.f32 %v1157, %v1161
        %v1163 = vpack.c.bf16 %v1162, %v1162
        %1164 = vrot.lane.b32.xlu0 %v960, 40
        %v1165 = vpop.permute.xlu0 %1164
        %v1167 = vsel %vm963, %v1163, 0
        %v1170 = vsel %vm1000, %v1165, 0
        %1172 = vmatpush.bf16.msra.mxu0 0
        %1173 = vmatpush.bf16.msra.mxu0 0
        %1174 = vmatpush.bf16.msra.mxu0 0
        %1175 = vmatpush.bf16.msra.mxu0 0
        %1176 = vmatpush.bf16.msra.mxu0 0
        %1177 = vmatpush.bf16.msra.mxu0 0
        %1178 = vmatpush.bf16.msra.mxu0 0
        %1179 = vmatpush.bf16.msra.mxu0 %v1170
        %1180 = vmatmul.bf16.gmra.mxu0 %v1167
        %v1181 = vpop.f32.mrf.mxu0
        %v1182 = vadd.f32 0.0, %v1181
        %v1183 = vpop.f32.mrf.mxu0
        %1184 = vdwg.mxu0
        %1186 = vrot.lane.b32.xlu0 %v1070, 8
        %v1187 = vpop.permute.xlu0 %1186
        %1190 = vrot.lane.b32.xlu0 %v1126, 16
        %v1191 = vpop.permute.xlu0 %1190
        %1194 = vrot.lane.b32.xlu0 %v1182, 24
        %v1195 = vpop.permute.xlu0 %1194
        %v1197 = vsel %vm963, %v1014, %v1187
        %vm1198 = vcmask 130048
        %v1199 = vsel %vm1198, %v1197, %v1191
        %vm1200 = vcmask 195584
        %v1201 = vsel %vm1200, %v1199, %v1195
        %v1202 = vpack.c.bf16 %v1201, %v1201
        %v1203 = vld [vmem:[%s861] sm:$0xf]
        %v1204 = vld [vmem:[%s861 + $0x4] sm:$0xf]
        %v1205 = vld [vmem:[%s861 + $0x8] sm:$0xf]
        %v1206 = vld [vmem:[%s861 + $0xc] sm:$0xf]
        %v1207 = vld [vmem:[%s710] sm:$0x1]
        %v1209 = vperm.slane %v1207, 0
        %v1215 = vunpack.c.l.b16 %v1203
        %v1216 = vunpack.c.l.b16 %v1204
        %v1217 = vunpack.c.l.b16 %v1205
        %v1218 = vunpack.c.l.b16 %v1206
        %v1219 = vpack.c.b16 %v1216, %v1215
        %v1220 = vpack.c.b16 %v1218, %v1217
        %v1224 = vsel %vm940, %v1202, 0
        %1226 = vmatpush.bf16.msra.mxu0 0
        %1227 = vmatpush.bf16.msra.mxu0 0
        %1228 = vmatpush.bf16.msra.mxu0 0
        %1229 = vmatpush.bf16.msra.mxu0 0
        %1230 = vmatpush.bf16.msra.mxu0 0
        %1231 = vmatpush.bf16.msra.mxu0 0
        %1232 = vmatpush.bf16.msra.mxu0 %v1220
        %1233 = vmatpush.bf16.msra.mxu0 %v1219
        %1234 = vmatmul.bf16.gmra.mxu0 %v1224
        %v1235 = vpop.f32.mrf.mxu0
        %v1236 = vadd.f32 %v1209, %v1235
        %v1237 = vpop.f32.mrf.mxu0
        %1238 = vdwg.mxu0
        %v1239 = vadd.f32 %v918, %v1236
        %v1240 = vld [vmem:[%s874] sm:$0x1]
        %v1241 = vld [vmem:[%s737] sm:$0x1]
        %v1242 = vsel %vm940, %v1239, 0.0
        %1243 = vadd.xlane.f32.xlu0 %v1242
        %v1244 = vpop.xlane.xlu0 %1243
        %v1245 = vrcp.pop 32.0
        %v1246 = vmul.f32 32.0, %v1245
        %v1247 = vsub.f32 1.0, %v1246
        %v1248 = vmul.f32 %v1245, %v1247
        %v1249 = vadd.f32 %v1245, %v1248
        %vm1250 = vweird.f32 %v1245
        %v1251 = vsel %vm1250, %v1245, %v1249
        %v1252 = vmul.f32 %v1244, %v1251
        %v1253 = vsub.f32 %v1239, %v1252
        %v1254 = vmul.f32 %v1253, %v1253
        %v1255 = vsel %vm940, %v1254, 0.0
        %1256 = vadd.xlane.f32.xlu0 %v1255
        %v1257 = vpop.xlane.xlu0 %1256
        %v1258 = vmul.f32 %v1257, %v1251
        %v1259 = vadd.f32 %v1258, 1e-05
        %v1260 = vrsqrt.pop %v1259
        %v1261 = vmul.f32 %v1260, %v1259
        %v1262 = vmul.f32 %v1261, %v1260
        %v1263 = vmul.f32 0.5, %v1262
        %v1264 = vsub.f32 1.5, %v1263
        %v1265 = vmul.f32 %v1260, %v1264
        %vm1266 = vweird.f32 %v1259
        %vm1267 = vweird.f32 %v1260
        %vm1268 = vmor %vm1266, %vm1267
        %v1269 = vsel %vm1268, %v1260, %v1265
        %v1270 = vmul.f32 %v1253, %v1269
        %v1272 = vperm.slane %v1240, 0
        %v1274 = vmul.f32 %v1270, %v1272
        %v1276 = vperm.slane %v1241, 0
        %v1278 = vadd.f32 %v1274, %v1276
        %v1279 = vpack.c.bf16 %v1278, %v1278
        %v1280 = vld [vmem:[%s866] sm:$0xf]
        %v1281 = vld [vmem:[%s866 + $0x4] sm:$0xf]
        %v1282 = vld [vmem:[%s866 + $0x8] sm:$0xf]
        %v1283 = vld [vmem:[%s866 + $0xc] sm:$0xf]
        %v1284 = vld [vmem:[%s719] sm:$0x1]
        %v1286 = vperm.slane %v1284, 0
        %v1292 = vunpack.c.l.b16 %v1280
        %v1293 = vunpack.c.l.b16 %v1281
        %v1294 = vunpack.c.l.b16 %v1282
        %v1295 = vunpack.c.l.b16 %v1283
        %v1296 = vpack.c.b16 %v1293, %v1292
        %v1297 = vpack.c.b16 %v1295, %v1294
        %v1301 = vsel %vm940, %v1279, 0
        %1303 = vmatpush.bf16.msra.mxu0 0
        %1304 = vmatpush.bf16.msra.mxu0 0
        %1305 = vmatpush.bf16.msra.mxu0 0
        %1306 = vmatpush.bf16.msra.mxu0 0
        %1307 = vmatpush.bf16.msra.mxu0 0
        %1308 = vmatpush.bf16.msra.mxu0 0
        %1309 = vmatpush.bf16.msra.mxu0 %v1297
        %1310 = vmatpush.bf16.msra.mxu0 %v1296
        %1311 = vmatmul.bf16.gmra.mxu0 %v1301
        %v1312 = vpop.f32.mrf.mxu0
        %v1313 = vadd.f32 %v1286, %v1312
        %v1314 = vpop.f32.mrf.mxu0
        %1315 = vdwg.mxu0
        %v1316 = vmax.f32 %v1313, 0.0
        %v1317 = vpack.c.bf16 %v1316, %v1316
        %v1318 = vld [vmem:[%s871] sm:$0xf]
        %v1319 = vld [vmem:[%s871 + $0x4] sm:$0xf]
        %v1320 = vld [vmem:[%s871 + $0x8] sm:$0xf]
        %v1321 = vld [vmem:[%s871 + $0xc] sm:$0xf]
        %v1322 = vld [vmem:[%s871 + $0x10] sm:$0xf]
        %v1323 = vld [vmem:[%s871 + $0x14] sm:$0xf]
        %v1324 = vld [vmem:[%s871 + $0x18] sm:$0xf]
        %v1325 = vld [vmem:[%s871 + $0x1c] sm:$0xf]
        %v1326 = vld [vmem:[%s728] sm:$0x1]
        %v1328 = vperm.slane %v1326, 0
        %v1338 = vunpack.c.l.b16 %v1318
        %v1339 = vunpack.c.l.b16 %v1319
        %v1340 = vunpack.c.l.b16 %v1320
        %v1341 = vunpack.c.l.b16 %v1321
        %v1342 = vunpack.c.l.b16 %v1322
        %v1343 = vunpack.c.l.b16 %v1323
        %v1344 = vunpack.c.l.b16 %v1324
        %v1345 = vunpack.c.l.b16 %v1325
        %v1346 = vpack.c.b16 %v1339, %v1338
        %v1347 = vpack.c.b16 %v1341, %v1340
        %v1348 = vpack.c.b16 %v1343, %v1342
        %v1349 = vpack.c.b16 %v1345, %v1344
        %vm1354 = vcmask 523264
        %v1356 = vsel %vm1354, %v1317, 0
        %1358 = vmatpush.bf16.msra.mxu0 0
        %1359 = vmatpush.bf16.msra.mxu0 0
        %1360 = vmatpush.bf16.msra.mxu0 0
        %1361 = vmatpush.bf16.msra.mxu0 0
        %1362 = vmatpush.bf16.msra.mxu0 %v1349
        %1363 = vmatpush.bf16.msra.mxu0 %v1348
        %1364 = vmatpush.bf16.msra.mxu0 %v1347
        %1365 = vmatpush.bf16.msra.mxu0 %v1346
        %1366 = vmatmul.bf16.gmra.mxu0 %v1356
        %v1367 = vpop.f32.mrf.mxu0
        %v1368 = vadd.f32 %v1328, %v1367
        %v1369 = vpop.f32.mrf.mxu0
        %1370 = vdwg.mxu0
        %v1371 = vadd.f32 %v1278, %v1368
        %v1372 = vld [vmem:[%s877] sm:$0x1]
        %v1373 = vld [vmem:[%s746] sm:$0x1]
        %v1374 = vsel %vm940, %v1371, 0.0
        %1375 = vadd.xlane.f32.xlu0 %v1374
        %v1376 = vpop.xlane.xlu0 %1375
        %v1377 = vmul.f32 %v1376, %v1251
        %v1378 = vsub.f32 %v1371, %v1377
        %v1379 = vmul.f32 %v1378, %v1378
        %v1380 = vsel %vm940, %v1379, 0.0
        %1381 = vadd.xlane.f32.xlu0 %v1380
        %v1382 = vpop.xlane.xlu0 %1381
        %v1383 = vmul.f32 %v1382, %v1251
        %v1384 = vadd.f32 %v1383, 1e-05
        %v1385 = vrsqrt.pop %v1384
        %v1386 = vmul.f32 %v1385, %v1384
        %v1387 = vmul.f32 %v1386, %v1385
        %v1388 = vmul.f32 0.5, %v1387
        %v1389 = vsub.f32 1.5, %v1388
        %v1390 = vmul.f32 %v1385, %v1389
        %vm1391 = vweird.f32 %v1384
        %vm1392 = vweird.f32 %v1385
        %vm1393 = vmor %vm1391, %vm1392
        %v1394 = vsel %vm1393, %v1385, %v1390
        %v1395 = vmul.f32 %v1378, %v1394
        %v1397 = vperm.slane %v1372, 0
        %v1399 = vmul.f32 %v1395, %v1397
        %v1401 = vperm.slane %v1373, 0
        %v1403 = vadd.f32 %v1399, %v1401
        %1404 = vst.msk [vmem:[#allocation2] sm:$0xff] %vm940, %v1403
        %p1405 = scmp.eq.s32.totalorder %s39, 1
        // Predicated region
        $region121: #{tpu_custom_call.1} parent=83 // pred_check
          %p1406 = pneg %p1405
        $region122: #{tpu_custom_call.1} parent=83 // pred_check_branch
          %1408 = sbr.rel (%p1406) target = $region124
        $region123: #{tpu_custom_call.1} parent=83 // pred_region
          %v1409 = vld [vmem:[#allocation2] sm:$0xff]
          %v1410 = vsel %vm940, %v1409, 0.0
          %1411 = vst [vmem:[%s847 - $0x7] sm:$0x80] %v1410
        $region124: #{tpu_custom_call.1} parent=83 // pred_fallthru
          _
        %s1412 = sand.u32 %s460, 1
        %s1413 = scalar_lea.sflag [#allocation5], %s1412
        %s1414 = sand.u32 %s460, 1
        %s1415 = scalar_lea.vmem [#allocation14], %s1414
        // Predicated region
        $region125: #{tpu_custom_call.1} parent=83 // pred_check
          %p1416 = pneg %p470
        $region126: #{tpu_custom_call.1} parent=83 // pred_check_branch
          %1418 = sbr.rel (%p1416) target = $region128
        $region127: #{tpu_custom_call.1} parent=83 // pred_region
          %1420 = vsyncadd %s1413, 0
          %s1421 = scalar_lea.hbm %s16, %s38
          %s1423 = sshll.u32 %s1415, 4
          %s1424 = int_to_ptr.vmem [resolvable:$true] %s1423
          %s1425 = sshll.u32 %s1421, 4
          %s1426 = int_to_ptr.hbm [resolvable:$true] %s1425
          %1428 = dma.vmem_to_hbm [thread:$0]  %s1424, 16, %s1426, %s1413
        $region128: #{tpu_custom_call.1} parent=83 // pred_fallthru
          _
      $region84: #{tpu_custom_call.1} parent=5 // pred_fallthru
        _
      %p1429 = scmp.le.s32.totalorder 2, %s29
      // Predicated region
      $region129: #{tpu_custom_call.1} parent=5 // pred_check
        %p1430 = pneg %p1429
      $region130: #{tpu_custom_call.1} parent=5 // pred_check_branch
        %1432 = sbr.rel (%p1430) target = $region132
      $region131: #{tpu_custom_call.1} parent=5 // pred_region
        %s1433 = ssub.s32 %s29, 2
        // Predicated region
        $region133: #{tpu_custom_call.1} parent=131 // pred_check
          %p1434 = pneg %p476
        $region134: #{tpu_custom_call.1} parent=131 // pred_check_branch
          %1436 = sbr.rel (%p1434) target = $region136
        $region135: #{tpu_custom_call.1} parent=131 // pred_region
          %s1437 = sand.u32 %s461, 1
          %s1438 = scalar_lea.sflag [#allocation5], %s1437
          %s1439 = sand.u32 %s461, 1
          %s1440 = scalar_lea.vmem [#allocation14], %s1439
          %1442 = dma.done %s1438, 16
        $region136: #{tpu_custom_call.1} parent=131 // pred_fallthru
          _
      $region132: #{tpu_custom_call.1} parent=5 // pred_fallthru
        _
    $region6: #{tpu_custom_call.1} parent=1 // loop_footer
      %s33 = sadd.s32 1, %s29
    $region7: #{tpu_custom_call.1} parent=1 // loop_footer_branch
      %28 = sbr.rel target = $region3
    $region8: #{tpu_custom_call.1} parent=1 // loop_exit
      _
    %1443 = vsyncpa [#allocation4], 1
    %s1444 = scalar_lea.sflag [#allocation4], 1
    %1445 = vsyncpa %s1444, 1
    %1446 = vsyncpa [#allocation7], 1
    %1447 = vsyncpa [#allocation5], 1
    %s1448 = scalar_lea.sflag [#allocation5], 1
    %1449 = vsyncpa %s1448, 1

</llo_original>
